<compile_context>
chip_gen: v5e
topology: v5e:2x2
jax: 0.10.0
libtpu: 0.0.40
codegen_flags: <defaults>
</compile_context>

<pallas_src>
import functools

import jax
import jax.numpy as jnp
from jax import lax
from jax.experimental import pallas as pl
from jax.experimental.pallas import tpu as pltpu


def mha_kernel(q_ref, k_ref, v_ref, wq_ref, wk_ref, wv_ref, wo_ref, o_ref,
               qproj_scr, m_scr, l_scr, acc_scr, *, n_head, d_k, d_v, scale):
    # TODO(synk): mask=None and attn_drop=0.0 paths only (matches defaults).
    ki = pl.program_id(2)
    nk = pl.num_programs(2)

    bf16 = jnp.bfloat16
    f32 = jnp.float32

    @pl.when(ki == 0)
    def _init():
        # Project the q tile for ALL heads at once (MXU N = n_head*d_k) and
        # fold the 1/sqrt(d_k) scale here (touches Lq*n_head*d_k elements
        # instead of Lq*Lk score elements).
        qproj_scr[...] = jnp.dot(q_ref[...].astype(bf16), wq_ref[...],
                                 preferred_element_type=f32) * scale
        m_scr[...] = jnp.full(m_scr.shape, -jnp.inf, dtype=f32)
        l_scr[...] = jnp.zeros(l_scr.shape, dtype=f32)
        acc_scr[...] = jnp.zeros(acc_scr.shape, dtype=f32)

    # Project this K/V tile for ALL heads in one wide matmul each.
    kh_all = jnp.dot(k_ref[...].astype(bf16), wk_ref[...],
                     preferred_element_type=f32)              # (tk, H*d_k)
    vh_all = jnp.dot(v_ref[...].astype(bf16), wv_ref[...],
                     preferred_element_type=f32)              # (tk, H*d_v)

    qproj = qproj_scr[...]                                    # (tq, H*d_k) f32

    # Contract the last dim of both operands: no explicit kh.T.
    dn = (((1,), (1,)), ((), ()))

    for h in range(n_head):                                   # static unroll
        qh = qproj[:, h * d_k:(h + 1) * d_k].astype(bf16)     # (tq, d_k)
        kh = kh_all[:, h * d_k:(h + 1) * d_k].astype(bf16)    # (tk, d_k)
        vh = vh_all[:, h * d_v:(h + 1) * d_v].astype(bf16)    # (tk, d_v)

        s = lax.dot_general(qh, kh, dn,
                            preferred_element_type=f32)       # (tq, tk)

        # Online softmax update (all state in f32 VMEM scratch).
        m_prev = m_scr[h]                                     # (tq, 1)
        m_new = jnp.maximum(m_prev, jnp.max(s, axis=-1, keepdims=True))
        alpha = jnp.exp(m_prev - m_new)
        p = jnp.exp(s - m_new)
        l_scr[h] = alpha * l_scr[h] + jnp.sum(p, axis=-1, keepdims=True)
        acc_scr[h] = alpha * acc_scr[h] + jnp.dot(
            p.astype(bf16), vh, preferred_element_type=f32)
        m_scr[h] = m_new

    @pl.when(ki == nk - 1)
    def _finalize():
        # Concat(head_h) @ Wo == sum_h ctx_h @ Wo[h*d_v:(h+1)*d_v, :]
        wo = wo_ref[...]                                      # (H*d_v, d_model) bf16
        out = jnp.zeros(o_ref.shape, dtype=f32)
        for h in range(n_head):
            ctx_h = acc_scr[h] * pl.reciprocal(l_scr[h], approx=True)
            out = out + jnp.dot(ctx_h.astype(bf16),
                                wo[h * d_v:(h + 1) * d_v, :],
                                preferred_element_type=f32)
        # Single lane-dense store in the output dtype.
        o_ref[...] = out.astype(o_ref.dtype)


def multi_head_attention(q, k, v, wq, wk, wv, wo, n_head, *, tq=256, tk=512):
    """q,k,v: [b, L, d_model]; wq/wk: [d_model, n_head*d_k];
    wv: [d_model, n_head*d_v]; wo: [n_head*d_v, d_model] (x @ W layout)."""
    b, Lq, d_model = q.shape
    Lk = k.shape[1]
    d_k = d_model // n_head
    d_v = wv.shape[1] // n_head
    scale = float(d_k) ** -0.5

    tq = min(tq, Lq)
    tk = min(tk, Lk)
    assert Lq % tq == 0 and Lk % tk == 0, "sequence lengths must divide tiles"

    # bf16 weights: halves weight DMA traffic; all matmuls still accumulate f32.
    bf16 = jnp.bfloat16
    wq_b, wk_b, wv_b, wo_b = (wq.astype(bf16), wk.astype(bf16),
                              wv.astype(bf16), wo.astype(bf16))

    kernel = functools.partial(mha_kernel, n_head=n_head, d_k=d_k, d_v=d_v,
                               scale=scale)

    grid = (b, Lq // tq, Lk // tk)    # reduction (Lk) axis kept last

    return pl.pallas_call(
        kernel,
        out_shape=jax.ShapeDtypeStruct((b, Lq, d_model), q.dtype),
        grid=grid,
        in_specs=[
            # Leading size-1 batch dim squeezed (None) -> 2-D refs in-kernel.
            pl.BlockSpec((None, tq, d_model), lambda bi, qi, ki: (bi, qi, 0)),
            pl.BlockSpec((None, tk, d_model), lambda bi, qi, ki: (bi, ki, 0)),
            pl.BlockSpec((None, tk, d_model), lambda bi, qi, ki: (bi, ki, 0)),
            # Full weight matrices, resident (constant index map -> one DMA).
            pl.BlockSpec((d_model, n_head * d_k), lambda bi, qi, ki: (0, 0)),
            pl.BlockSpec((d_model, n_head * d_k), lambda bi, qi, ki: (0, 0)),
            pl.BlockSpec((d_model, n_head * d_v), lambda bi, qi, ki: (0, 0)),
            pl.BlockSpec((n_head * d_v, d_model), lambda bi, qi, ki: (0, 0)),
        ],
        out_specs=pl.BlockSpec((None, tq, d_model),
                               lambda bi, qi, ki: (bi, qi, 0)),
        scratch_shapes=[
            pltpu.VMEM((tq, n_head * d_k), jnp.float32),   # scaled q projection
            pltpu.VMEM((n_head, tq, 1), jnp.float32),      # running max  m
            pltpu.VMEM((n_head, tq, 1), jnp.float32),      # running sum  l
            pltpu.VMEM((n_head, tq, d_v), jnp.float32),    # context accumulator
        ],
        compiler_params=pltpu.CompilerParams(
            dimension_semantics=("parallel", "parallel", "arbitrary")),
    )(q, k, v, wq_b, wk_b, wv_b, wo_b)


def reference_mha(q, k, v, wq, wk, wv, wo, n_head):
    """Pure-JAX replica of the PyTorch forward (mask=None, attn_drop=0).
    Inputs are rounded to bf16 to match the kernel's MXU operand precision
    (accumulation stays f32), so the tolerance can stay tight."""
    f32 = jnp.float32
    q, k, v, wq, wk, wv, wo = (x.astype(jnp.bfloat16).astype(f32)
                               for x in (q, k, v, wq, wk, wv, wo))
    b, L, d_model = q.shape
    d_k = d_model // n_head
    d_v = wv.shape[1] // n_head
    qh = (q @ wq).reshape(b, -1, n_head, d_k).transpose(0, 2, 1, 3)
    kh = (k @ wk).reshape(b, -1, n_head, d_k).transpose(0, 2, 1, 3)
    vh = (v @ wv).reshape(b, -1, n_head, d_v).transpose(0, 2, 1, 3)
    attn = jnp.einsum("bhqd,bhkd->bhqk", qh, kh) * (float(d_k) ** -0.5)
    attn = jax.nn.softmax(attn, axis=-1)
    x = jnp.einsum("bhqk,bhkd->bhqd", attn, vh)
    x = x.transpose(0, 2, 1, 3).reshape(b, -1, n_head * d_v)
    return x @ wo


if __name__ == "__main__":
    # Small, forward-consistent shapes.
    batch, seq, d_model, n_head = 2, 8, 32, 4
    d_k = d_model // n_head      # 8
    d_v = d_k                    # keep head dim consistent for out_proj

    key = jax.random.PRNGKey(0)
    kq, kk, kv, kwq, kwk, kwv, kwo = jax.random.split(key, 7)

    q = jax.random.normal(kq, (batch, seq, d_model), dtype=jnp.float32)
    k = jax.random.normal(kk, (batch, seq, d_model), dtype=jnp.float32)
    v = jax.random.normal(kv, (batch, seq, d_model), dtype=jnp.float32)

    # Deterministic synthetic weights (x @ W layout, equivalent to PyTorch W.T).
    wq = 0.1 * jax.random.normal(kwq, (d_model, n_head * d_k), dtype=jnp.float32)
    wk = 0.1 * jax.random.normal(kwk, (d_model, n_head * d_k), dtype=jnp.float32)
    wv = 0.1 * jax.random.normal(kwv, (d_model, n_head * d_v), dtype=jnp.float32)
    wo = 0.1 * jax.random.normal(kwo, (n_head * d_v, d_model), dtype=jnp.float32)

    out = multi_head_attention(q, k, v, wq, wk, wv, wo, n_head)
    out = jax.block_until_ready(out)

    ref = reference_mha(q, k, v, wq, wk, wv, wo, n_head)
    assert out.shape == (batch, seq, d_model)
    assert jnp.allclose(out, ref, atol=2e-2, rtol=2e-2), "mismatch vs. reference"

    print("KERNEL_OK")
</pallas_src>

<mosaic_0001>
module attributes {stable_mosaic.version = 11 : i64} {
  func.func @mha_kernel(%arg0: i32, %arg1: i32, %arg2: i32, %arg3: memref<1x8x32xf32, #tpu.memory_space<vmem>>, %arg4: memref<1x8x32xf32, #tpu.memory_space<vmem>>, %arg5: memref<1x8x32xf32, #tpu.memory_space<vmem>>, %arg6: memref<32x32xbf16, #tpu.memory_space<vmem>>, %arg7: memref<32x32xbf16, #tpu.memory_space<vmem>>, %arg8: memref<32x32xbf16, #tpu.memory_space<vmem>>, %arg9: memref<32x32xbf16, #tpu.memory_space<vmem>>, %arg10: memref<1x8x32xf32, #tpu.memory_space<vmem>>, %arg11: memref<8x32xf32, #tpu.memory_space<vmem>>, %arg12: memref<4x8x1xf32, #tpu.memory_space<vmem>>, %arg13: memref<4x8x1xf32, #tpu.memory_space<vmem>>, %arg14: memref<4x8x8xf32, #tpu.memory_space<vmem>>) attributes {dimension_semantics = [#tpu.dimension_semantics<parallel>, #tpu.dimension_semantics<parallel>, #tpu.dimension_semantics<arbitrary>], iteration_bounds = array<i64: 2, 1, 1>, scalar_prefetch = 0 : i64, scratch_operands = 4 : i64, tpu.core_type = #tpu.core_type<tc>, window_params = [{transform_indices = @transform_0, window_bounds = array<i64: 1, 8, 32>}, {transform_indices = @transform_1, window_bounds = array<i64: 1, 8, 32>}, {transform_indices = @transform_2, window_bounds = array<i64: 1, 8, 32>}, {pipeline_mode = #tpu.pipeline_mode<synchronous>, transform_indices = @transform_3, window_bounds = array<i64: 32, 32>}, {pipeline_mode = #tpu.pipeline_mode<synchronous>, transform_indices = @transform_4, window_bounds = array<i64: 32, 32>}, {pipeline_mode = #tpu.pipeline_mode<synchronous>, transform_indices = @transform_5, window_bounds = array<i64: 32, 32>}, {pipeline_mode = #tpu.pipeline_mode<synchronous>, transform_indices = @transform_6, window_bounds = array<i64: 32, 32>}, {transform_indices = @transform_7, window_bounds = array<i64: 1, 8, 32>}]} {
    %c0_i32 = arith.constant 0 : i32
    %0 = arith.cmpi eq, %arg2, %c0_i32 : i32
    %1 = arith.extui %0 : i1 to i32
    %c0_i32_0 = arith.constant 0 : i32
    %2 = arith.cmpi ne, %1, %c0_i32_0 : i32
    scf.if %2 {
      %c0_100 = arith.constant 0 : index
      %c0_101 = arith.constant 0 : index
      %c0_102 = arith.constant 0 : index
      %173 = vector.load %arg3[%c0_100, %c0_101, %c0_102] : memref<1x8x32xf32, #tpu.memory_space<vmem>>, vector<1x8x32xf32>
      %174 = vector.shape_cast %173 : vector<1x8x32xf32> to vector<8x32xf32>
      %175 = arith.truncf %174 : vector<8x32xf32> to vector<8x32xbf16>
      %c0_103 = arith.constant 0 : index
      %c0_104 = arith.constant 0 : index
      %176 = vector.load %arg6[%c0_103, %c0_104] : memref<32x32xbf16, #tpu.memory_space<vmem>>, vector<32x32xbf16>
      %cst_105 = arith.constant dense<0.000000e+00> : vector<8x32xf32>
      %177 = tpu.matmul %175, %176, %cst_105 {dimension_numbers = #tpu.dot_dimension_numbers<[1], [0], [0], [1], [0, 0, 1, 1], [], []>} : vector<8x32xbf16>, vector<32x32xbf16>, vector<8x32xf32> -> vector<8x32xf32>
      %cst_106 = arith.constant 0.353553385 : f32
      %178 = vector.broadcast %cst_106 : f32 to vector<8x32xf32>
      %179 = arith.mulf %177, %178 : vector<8x32xf32>
      %c0_107 = arith.constant 0 : index
      %c0_108 = arith.constant 0 : index
      %180 = vector.load %arg11[%c0_107, %c0_108] : memref<8x32xf32, #tpu.memory_space<vmem>>, vector<8x32xf32>
      tpu.vector_store %arg11[%c0_107, %c0_108], %179 {strides = array<i32>} : memref<8x32xf32, #tpu.memory_space<vmem>>, vector<8x32xf32>,
      %cst_109 = arith.constant 0xFF800000 : f32
      %181 = vector.broadcast %cst_109 : f32 to vector<4x8x1xf32>
      %c0_110 = arith.constant 0 : index
      %c0_111 = arith.constant 0 : index
      %c0_112 = arith.constant 0 : index
      %182 = vector.load %arg12[%c0_110, %c0_111, %c0_112] : memref<4x8x1xf32, #tpu.memory_space<vmem>>, vector<4x8x1xf32>
      tpu.vector_store %arg12[%c0_110, %c0_111, %c0_112], %181 {strides = array<i32>} : memref<4x8x1xf32, #tpu.memory_space<vmem>>, vector<4x8x1xf32>,
      %cst_113 = arith.constant 0.000000e+00 : f32
      %183 = vector.broadcast %cst_113 : f32 to vector<4x8x1xf32>
      %c0_114 = arith.constant 0 : index
      %c0_115 = arith.constant 0 : index
      %c0_116 = arith.constant 0 : index
      %184 = vector.load %arg13[%c0_114, %c0_115, %c0_116] : memref<4x8x1xf32, #tpu.memory_space<vmem>>, vector<4x8x1xf32>
      tpu.vector_store %arg13[%c0_114, %c0_115, %c0_116], %183 {strides = array<i32>} : memref<4x8x1xf32, #tpu.memory_space<vmem>>, vector<4x8x1xf32>,
      %cst_117 = arith.constant 0.000000e+00 : f32
      %185 = vector.broadcast %cst_117 : f32 to vector<4x8x8xf32>
      %c0_118 = arith.constant 0 : index
      %c0_119 = arith.constant 0 : index
      %c0_120 = arith.constant 0 : index
      %186 = vector.load %arg14[%c0_118, %c0_119, %c0_120] : memref<4x8x8xf32, #tpu.memory_space<vmem>>, vector<4x8x8xf32>
      tpu.vector_store %arg14[%c0_118, %c0_119, %c0_120], %185 {strides = array<i32>} : memref<4x8x8xf32, #tpu.memory_space<vmem>>, vector<4x8x8xf32>,
    } else {
    }
    %c0 = arith.constant 0 : index
    %c0_1 = arith.constant 0 : index
    %c0_2 = arith.constant 0 : index
    %3 = vector.load %arg4[%c0, %c0_1, %c0_2] : memref<1x8x32xf32, #tpu.memory_space<vmem>>, vector<1x8x32xf32>
    %4 = vector.shape_cast %3 : vector<1x8x32xf32> to vector<8x32xf32>
    %5 = arith.truncf %4 : vector<8x32xf32> to vector<8x32xbf16>
    %c0_3 = arith.constant 0 : index
    %c0_4 = arith.constant 0 : index
    %6 = vector.load %arg7[%c0_3, %c0_4] : memref<32x32xbf16, #tpu.memory_space<vmem>>, vector<32x32xbf16>
    %cst = arith.constant dense<0.000000e+00> : vector<8x32xf32>
    %7 = tpu.matmul %5, %6, %cst {dimension_numbers = #tpu.dot_dimension_numbers<[1], [0], [0], [1], [0, 0, 1, 1], [], []>} : vector<8x32xbf16>, vector<32x32xbf16>, vector<8x32xf32> -> vector<8x32xf32>
    %c0_5 = arith.constant 0 : index
    %c0_6 = arith.constant 0 : index
    %c0_7 = arith.constant 0 : index
    %8 = vector.load %arg5[%c0_5, %c0_6, %c0_7] : memref<1x8x32xf32, #tpu.memory_space<vmem>>, vector<1x8x32xf32>
    %9 = vector.shape_cast %8 : vector<1x8x32xf32> to vector<8x32xf32>
    %10 = arith.truncf %9 : vector<8x32xf32> to vector<8x32xbf16>
    %c0_8 = arith.constant 0 : index
    %c0_9 = arith.constant 0 : index
    %11 = vector.load %arg8[%c0_8, %c0_9] : memref<32x32xbf16, #tpu.memory_space<vmem>>, vector<32x32xbf16>
    %cst_10 = arith.constant dense<0.000000e+00> : vector<8x32xf32>
    %12 = tpu.matmul %10, %11, %cst_10 {dimension_numbers = #tpu.dot_dimension_numbers<[1], [0], [0], [1], [0, 0, 1, 1], [], []>} : vector<8x32xbf16>, vector<32x32xbf16>, vector<8x32xf32> -> vector<8x32xf32>
    %c0_11 = arith.constant 0 : index
    %c0_12 = arith.constant 0 : index
    %13 = vector.load %arg11[%c0_11, %c0_12] : memref<8x32xf32, #tpu.memory_space<vmem>>, vector<8x32xf32>
    %14 = vector.extract_strided_slice %13 {offsets = [0, 0], sizes = [8, 8], strides = [1, 1]} : vector<8x32xf32> to vector<8x8xf32>
    %15 = arith.truncf %14 : vector<8x8xf32> to vector<8x8xbf16>
    %16 = vector.extract_strided_slice %7 {offsets = [0, 0], sizes = [8, 8], strides = [1, 1]} : vector<8x32xf32> to vector<8x8xf32>
    %17 = arith.truncf %16 : vector<8x8xf32> to vector<8x8xbf16>
    %18 = vector.extract_strided_slice %12 {offsets = [0, 0], sizes = [8, 8], strides = [1, 1]} : vector<8x32xf32> to vector<8x8xf32>
    %19 = arith.truncf %18 : vector<8x8xf32> to vector<8x8xbf16>
    %cst_13 = arith.constant dense<0.000000e+00> : vector<8x8xf32>
    %20 = tpu.matmul %15, %17, %cst_13 {dimension_numbers = #tpu.dot_dimension_numbers<[1], [1], [0], [0], [0, 0, 1, 0], [], []>} : vector<8x8xbf16>, vector<8x8xbf16>, vector<8x8xf32> -> vector<8x8xf32>
    %c0_14 = arith.constant 0 : index
    %c0_15 = arith.constant 0 : index
    %c0_16 = arith.constant 0 : index
    %21 = vector.load %arg12[%c0_14, %c0_15, %c0_16] : memref<4x8x1xf32, #tpu.memory_space<vmem>>, vector<1x8x1xf32>
    %22 = vector.shape_cast %21 : vector<1x8x1xf32> to vector<8x1xf32>
    %cst_17 = arith.constant dense<0xFF800000> : vector<8xf32>
    %23 = vector.multi_reduction <maximumf>, %20, %cst_17 [1] : vector<8x8xf32> to vector<8xf32>
    %24 = vector.shape_cast %23 : vector<8xf32> to vector<8x1xf32>
    %25 = arith.maximumf %22, %24 : vector<8x1xf32>
    %26 = arith.subf %22, %25 : vector<8x1xf32>
    %27 = math.exp %26 : vector<8x1xf32>
    %28 = vector.broadcast %25 : vector<8x1xf32> to vector<8x8xf32>
    %29 = arith.subf %20, %28 : vector<8x8xf32>
    %30 = math.exp %29 : vector<8x8xf32>
    %c0_18 = arith.constant 0 : index
    %c0_19 = arith.constant 0 : index
    %c0_20 = arith.constant 0 : index
    %31 = vector.load %arg13[%c0_18, %c0_19, %c0_20] : memref<4x8x1xf32, #tpu.memory_space<vmem>>, vector<1x8x1xf32>
    %32 = vector.shape_cast %31 : vector<1x8x1xf32> to vector<8x1xf32>
    %33 = arith.mulf %27, %32 : vector<8x1xf32>
    %cst_21 = arith.constant dense<0.000000e+00> : vector<8xf32>
    %34 = vector.multi_reduction <add>, %30, %cst_21 [1] : vector<8x8xf32> to vector<8xf32>
    %35 = vector.shape_cast %34 : vector<8xf32> to vector<8x1xf32>
    %36 = arith.addf %33, %35 : vector<8x1xf32>
    %c0_22 = arith.constant 0 : index
    %c0_23 = arith.constant 0 : index
    %c0_24 = arith.constant 0 : index
    %37 = vector.load %arg13[%c0_22, %c0_23, %c0_24] : memref<4x8x1xf32, #tpu.memory_space<vmem>>, vector<1x8x1xf32>
    %38 = vector.shape_cast %37 : vector<1x8x1xf32> to vector<8x1xf32>
    %39 = vector.shape_cast %36 : vector<8x1xf32> to vector<1x8x1xf32>
    tpu.vector_store %arg13[%c0_22, %c0_23, %c0_24], %39 {strides = array<i32>} : memref<4x8x1xf32, #tpu.memory_space<vmem>>, vector<1x8x1xf32>,
    %c0_25 = arith.constant 0 : index
    %c0_26 = arith.constant 0 : index
    %c0_27 = arith.constant 0 : index
    %40 = vector.load %arg14[%c0_25, %c0_26, %c0_27] : memref<4x8x8xf32, #tpu.memory_space<vmem>>, vector<1x8x8xf32>
    %41 = vector.shape_cast %40 : vector<1x8x8xf32> to vector<8x8xf32>
    %42 = vector.broadcast %27 : vector<8x1xf32> to vector<8x8xf32>
    %43 = arith.mulf %42, %41 : vector<8x8xf32>
    %44 = arith.truncf %30 : vector<8x8xf32> to vector<8x8xbf16>
    %cst_28 = arith.constant dense<0.000000e+00> : vector<8x8xf32>
    %45 = tpu.matmul %44, %19, %cst_28 {dimension_numbers = #tpu.dot_dimension_numbers<[1], [0], [0], [1], [0, 0, 1, 1], [], []>} : vector<8x8xbf16>, vector<8x8xbf16>, vector<8x8xf32> -> vector<8x8xf32>
    %46 = arith.addf %43, %45 : vector<8x8xf32>
    %c0_29 = arith.constant 0 : index
    %c0_30 = arith.constant 0 : index
    %c0_31 = arith.constant 0 : index
    %47 = vector.load %arg14[%c0_29, %c0_30, %c0_31] : memref<4x8x8xf32, #tpu.memory_space<vmem>>, vector<1x8x8xf32>
    %48 = vector.shape_cast %47 : vector<1x8x8xf32> to vector<8x8xf32>
    %49 = vector.shape_cast %46 : vector<8x8xf32> to vector<1x8x8xf32>
    tpu.vector_store %arg14[%c0_29, %c0_30, %c0_31], %49 {strides = array<i32>} : memref<4x8x8xf32, #tpu.memory_space<vmem>>, vector<1x8x8xf32>,
    %c0_32 = arith.constant 0 : index
    %c0_33 = arith.constant 0 : index
    %c0_34 = arith.constant 0 : index
    %50 = vector.load %arg12[%c0_32, %c0_33, %c0_34] : memref<4x8x1xf32, #tpu.memory_space<vmem>>, vector<1x8x1xf32>
    %51 = vector.shape_cast %50 : vector<1x8x1xf32> to vector<8x1xf32>
    %52 = vector.shape_cast %25 : vector<8x1xf32> to vector<1x8x1xf32>
    tpu.vector_store %arg12[%c0_32, %c0_33, %c0_34], %52 {strides = array<i32>} : memref<4x8x1xf32, #tpu.memory_space<vmem>>, vector<1x8x1xf32>,
    %53 = vector.extract_strided_slice %13 {offsets = [0, 8], sizes = [8, 8], strides = [1, 1]} : vector<8x32xf32> to vector<8x8xf32>
    %54 = arith.truncf %53 : vector<8x8xf32> to vector<8x8xbf16>
    %55 = vector.extract_strided_slice %7 {offsets = [0, 8], sizes = [8, 8], strides = [1, 1]} : vector<8x32xf32> to vector<8x8xf32>
    %56 = arith.truncf %55 : vector<8x8xf32> to vector<8x8xbf16>
    %57 = vector.extract_strided_slice %12 {offsets = [0, 8], sizes = [8, 8], strides = [1, 1]} : vector<8x32xf32> to vector<8x8xf32>
    %58 = arith.truncf %57 : vector<8x8xf32> to vector<8x8xbf16>
    %cst_35 = arith.constant dense<0.000000e+00> : vector<8x8xf32>
    %59 = tpu.matmul %54, %56, %cst_35 {dimension_numbers = #tpu.dot_dimension_numbers<[1], [1], [0], [0], [0, 0, 1, 0], [], []>} : vector<8x8xbf16>, vector<8x8xbf16>, vector<8x8xf32> -> vector<8x8xf32>
    %c1 = arith.constant 1 : index
    %c0_36 = arith.constant 0 : index
    %c0_37 = arith.constant 0 : index
    %60 = vector.load %arg12[%c1, %c0_36, %c0_37] : memref<4x8x1xf32, #tpu.memory_space<vmem>>, vector<1x8x1xf32>
    %61 = vector.shape_cast %60 : vector<1x8x1xf32> to vector<8x1xf32>
    %cst_38 = arith.constant dense<0xFF800000> : vector<8xf32>
    %62 = vector.multi_reduction <maximumf>, %59, %cst_38 [1] : vector<8x8xf32> to vector<8xf32>
    %63 = vector.shape_cast %62 : vector<8xf32> to vector<8x1xf32>
    %64 = arith.maximumf %61, %63 : vector<8x1xf32>
    %65 = arith.subf %61, %64 : vector<8x1xf32>
    %66 = math.exp %65 : vector<8x1xf32>
    %67 = vector.broadcast %64 : vector<8x1xf32> to vector<8x8xf32>
    %68 = arith.subf %59, %67 : vector<8x8xf32>
    %69 = math.exp %68 : vector<8x8xf32>
    %c1_39 = arith.constant 1 : index
    %c0_40 = arith.constant 0 : index
    %c0_41 = arith.constant 0 : index
    %70 = vector.load %arg13[%c1_39, %c0_40, %c0_41] : memref<4x8x1xf32, #tpu.memory_space<vmem>>, vector<1x8x1xf32>
    %71 = vector.shape_cast %70 : vector<1x8x1xf32> to vector<8x1xf32>
    %72 = arith.mulf %66, %71 : vector<8x1xf32>
    %cst_42 = arith.constant dense<0.000000e+00> : vector<8xf32>
    %73 = vector.multi_reduction <add>, %69, %cst_42 [1] : vector<8x8xf32> to vector<8xf32>
    %74 = vector.shape_cast %73 : vector<8xf32> to vector<8x1xf32>
    %75 = arith.addf %72, %74 : vector<8x1xf32>
    %c1_43 = arith.constant 1 : index
    %c0_44 = arith.constant 0 : index
    %c0_45 = arith.constant 0 : index
    %76 = vector.load %arg13[%c1_43, %c0_44, %c0_45] : memref<4x8x1xf32, #tpu.memory_space<vmem>>, vector<1x8x1xf32>
    %77 = vector.shape_cast %76 : vector<1x8x1xf32> to vector<8x1xf32>
    %78 = vector.shape_cast %75 : vector<8x1xf32> to vector<1x8x1xf32>
    tpu.vector_store %arg13[%c1_43, %c0_44, %c0_45], %78 {strides = array<i32>} : memref<4x8x1xf32, #tpu.memory_space<vmem>>, vector<1x8x1xf32>,
    %c1_46 = arith.constant 1 : index
    %c0_47 = arith.constant 0 : index
    %c0_48 = arith.constant 0 : index
    %79 = vector.load %arg14[%c1_46, %c0_47, %c0_48] : memref<4x8x8xf32, #tpu.memory_space<vmem>>, vector<1x8x8xf32>
    %80 = vector.shape_cast %79 : vector<1x8x8xf32> to vector<8x8xf32>
    %81 = vector.broadcast %66 : vector<8x1xf32> to vector<8x8xf32>
    %82 = arith.mulf %81, %80 : vector<8x8xf32>
    %83 = arith.truncf %69 : vector<8x8xf32> to vector<8x8xbf16>
    %cst_49 = arith.constant dense<0.000000e+00> : vector<8x8xf32>
    %84 = tpu.matmul %83, %58, %cst_49 {dimension_numbers = #tpu.dot_dimension_numbers<[1], [0], [0], [1], [0, 0, 1, 1], [], []>} : vector<8x8xbf16>, vector<8x8xbf16>, vector<8x8xf32> -> vector<8x8xf32>
    %85 = arith.addf %82, %84 : vector<8x8xf32>
    %c1_50 = arith.constant 1 : index
    %c0_51 = arith.constant 0 : index
    %c0_52 = arith.constant 0 : index
    %86 = vector.load %arg14[%c1_50, %c0_51, %c0_52] : memref<4x8x8xf32, #tpu.memory_space<vmem>>, vector<1x8x8xf32>
    %87 = vector.shape_cast %86 : vector<1x8x8xf32> to vector<8x8xf32>
    %88 = vector.shape_cast %85 : vector<8x8xf32> to vector<1x8x8xf32>
    tpu.vector_store %arg14[%c1_50, %c0_51, %c0_52], %88 {strides = array<i32>} : memref<4x8x8xf32, #tpu.memory_space<vmem>>, vector<1x8x8xf32>,
    %c1_53 = arith.constant 1 : index
    %c0_54 = arith.constant 0 : index
    %c0_55 = arith.constant 0 : index
    %89 = vector.load %arg12[%c1_53, %c0_54, %c0_55] : memref<4x8x1xf32, #tpu.memory_space<vmem>>, vector<1x8x1xf32>
    %90 = vector.shape_cast %89 : vector<1x8x1xf32> to vector<8x1xf32>
    %91 = vector.shape_cast %64 : vector<8x1xf32> to vector<1x8x1xf32>
    tpu.vector_store %arg12[%c1_53, %c0_54, %c0_55], %91 {strides = array<i32>} : memref<4x8x1xf32, #tpu.memory_space<vmem>>, vector<1x8x1xf32>,
    %92 = vector.extract_strided_slice %13 {offsets = [0, 16], sizes = [8, 8], strides = [1, 1]} : vector<8x32xf32> to vector<8x8xf32>
    %93 = arith.truncf %92 : vector<8x8xf32> to vector<8x8xbf16>
    %94 = vector.extract_strided_slice %7 {offsets = [0, 16], sizes = [8, 8], strides = [1, 1]} : vector<8x32xf32> to vector<8x8xf32>
    %95 = arith.truncf %94 : vector<8x8xf32> to vector<8x8xbf16>
    %96 = vector.extract_strided_slice %12 {offsets = [0, 16], sizes = [8, 8], strides = [1, 1]} : vector<8x32xf32> to vector<8x8xf32>
    %97 = arith.truncf %96 : vector<8x8xf32> to vector<8x8xbf16>
    %cst_56 = arith.constant dense<0.000000e+00> : vector<8x8xf32>
    %98 = tpu.matmul %93, %95, %cst_56 {dimension_numbers = #tpu.dot_dimension_numbers<[1], [1], [0], [0], [0, 0, 1, 0], [], []>} : vector<8x8xbf16>, vector<8x8xbf16>, vector<8x8xf32> -> vector<8x8xf32>
    %c2 = arith.constant 2 : index
    %c0_57 = arith.constant 0 : index
    %c0_58 = arith.constant 0 : index
    %99 = vector.load %arg12[%c2, %c0_57, %c0_58] : memref<4x8x1xf32, #tpu.memory_space<vmem>>, vector<1x8x1xf32>
    %100 = vector.shape_cast %99 : vector<1x8x1xf32> to vector<8x1xf32>
    %cst_59 = arith.constant dense<0xFF800000> : vector<8xf32>
    %101 = vector.multi_reduction <maximumf>, %98, %cst_59 [1] : vector<8x8xf32> to vector<8xf32>
    %102 = vector.shape_cast %101 : vector<8xf32> to vector<8x1xf32>
    %103 = arith.maximumf %100, %102 : vector<8x1xf32>
    %104 = arith.subf %100, %103 : vector<8x1xf32>
    %105 = math.exp %104 : vector<8x1xf32>
    %106 = vector.broadcast %103 : vector<8x1xf32> to vector<8x8xf32>
    %107 = arith.subf %98, %106 : vector<8x8xf32>
    %108 = math.exp %107 : vector<8x8xf32>
    %c2_60 = arith.constant 2 : index
    %c0_61 = arith.constant 0 : index
    %c0_62 = arith.constant 0 : index
    %109 = vector.load %arg13[%c2_60, %c0_61, %c0_62] : memref<4x8x1xf32, #tpu.memory_space<vmem>>, vector<1x8x1xf32>
    %110 = vector.shape_cast %109 : vector<1x8x1xf32> to vector<8x1xf32>
    %111 = arith.mulf %105, %110 : vector<8x1xf32>
    %cst_63 = arith.constant dense<0.000000e+00> : vector<8xf32>
    %112 = vector.multi_reduction <add>, %108, %cst_63 [1] : vector<8x8xf32> to vector<8xf32>
    %113 = vector.shape_cast %112 : vector<8xf32> to vector<8x1xf32>
    %114 = arith.addf %111, %113 : vector<8x1xf32>
    %c2_64 = arith.constant 2 : index
    %c0_65 = arith.constant 0 : index
    %c0_66 = arith.constant 0 : index
    %115 = vector.load %arg13[%c2_64, %c0_65, %c0_66] : memref<4x8x1xf32, #tpu.memory_space<vmem>>, vector<1x8x1xf32>
    %116 = vector.shape_cast %115 : vector<1x8x1xf32> to vector<8x1xf32>
    %117 = vector.shape_cast %114 : vector<8x1xf32> to vector<1x8x1xf32>
    tpu.vector_store %arg13[%c2_64, %c0_65, %c0_66], %117 {strides = array<i32>} : memref<4x8x1xf32, #tpu.memory_space<vmem>>, vector<1x8x1xf32>,
    %c2_67 = arith.constant 2 : index
    %c0_68 = arith.constant 0 : index
    %c0_69 = arith.constant 0 : index
    %118 = vector.load %arg14[%c2_67, %c0_68, %c0_69] : memref<4x8x8xf32, #tpu.memory_space<vmem>>, vector<1x8x8xf32>
    %119 = vector.shape_cast %118 : vector<1x8x8xf32> to vector<8x8xf32>
    %120 = vector.broadcast %105 : vector<8x1xf32> to vector<8x8xf32>
    %121 = arith.mulf %120, %119 : vector<8x8xf32>
    %122 = arith.truncf %108 : vector<8x8xf32> to vector<8x8xbf16>
    %cst_70 = arith.constant dense<0.000000e+00> : vector<8x8xf32>
    %123 = tpu.matmul %122, %97, %cst_70 {dimension_numbers = #tpu.dot_dimension_numbers<[1], [0], [0], [1], [0, 0, 1, 1], [], []>} : vector<8x8xbf16>, vector<8x8xbf16>, vector<8x8xf32> -> vector<8x8xf32>
    %124 = arith.addf %121, %123 : vector<8x8xf32>
    %c2_71 = arith.constant 2 : index
    %c0_72 = arith.constant 0 : index
    %c0_73 = arith.constant 0 : index
    %125 = vector.load %arg14[%c2_71, %c0_72, %c0_73] : memref<4x8x8xf32, #tpu.memory_space<vmem>>, vector<1x8x8xf32>
    %126 = vector.shape_cast %125 : vector<1x8x8xf32> to vector<8x8xf32>
    %127 = vector.shape_cast %124 : vector<8x8xf32> to vector<1x8x8xf32>
    tpu.vector_store %arg14[%c2_71, %c0_72, %c0_73], %127 {strides = array<i32>} : memref<4x8x8xf32, #tpu.memory_space<vmem>>, vector<1x8x8xf32>,
    %c2_74 = arith.constant 2 : index
    %c0_75 = arith.constant 0 : index
    %c0_76 = arith.constant 0 : index
    %128 = vector.load %arg12[%c2_74, %c0_75, %c0_76] : memref<4x8x1xf32, #tpu.memory_space<vmem>>, vector<1x8x1xf32>
    %129 = vector.shape_cast %128 : vector<1x8x1xf32> to vector<8x1xf32>
    %130 = vector.shape_cast %103 : vector<8x1xf32> to vector<1x8x1xf32>
    tpu.vector_store %arg12[%c2_74, %c0_75, %c0_76], %130 {strides = array<i32>} : memref<4x8x1xf32, #tpu.memory_space<vmem>>, vector<1x8x1xf32>,
    %131 = vector.extract_strided_slice %13 {offsets = [0, 24], sizes = [8, 8], strides = [1, 1]} : vector<8x32xf32> to vector<8x8xf32>
    %132 = arith.truncf %131 : vector<8x8xf32> to vector<8x8xbf16>
    %133 = vector.extract_strided_slice %7 {offsets = [0, 24], sizes = [8, 8], strides = [1, 1]} : vector<8x32xf32> to vector<8x8xf32>
    %134 = arith.truncf %133 : vector<8x8xf32> to vector<8x8xbf16>
    %135 = vector.extract_strided_slice %12 {offsets = [0, 24], sizes = [8, 8], strides = [1, 1]} : vector<8x32xf32> to vector<8x8xf32>
    %136 = arith.truncf %135 : vector<8x8xf32> to vector<8x8xbf16>
    %cst_77 = arith.constant dense<0.000000e+00> : vector<8x8xf32>
    %137 = tpu.matmul %132, %134, %cst_77 {dimension_numbers = #tpu.dot_dimension_numbers<[1], [1], [0], [0], [0, 0, 1, 0], [], []>} : vector<8x8xbf16>, vector<8x8xbf16>, vector<8x8xf32> -> vector<8x8xf32>
    %c3 = arith.constant 3 : index
    %c0_78 = arith.constant 0 : index
    %c0_79 = arith.constant 0 : index
    %138 = vector.load %arg12[%c3, %c0_78, %c0_79] : memref<4x8x1xf32, #tpu.memory_space<vmem>>, vector<1x8x1xf32>
    %139 = vector.shape_cast %138 : vector<1x8x1xf32> to vector<8x1xf32>
    %cst_80 = arith.constant dense<0xFF800000> : vector<8xf32>
    %140 = vector.multi_reduction <maximumf>, %137, %cst_80 [1] : vector<8x8xf32> to vector<8xf32>
    %141 = vector.shape_cast %140 : vector<8xf32> to vector<8x1xf32>
    %142 = arith.maximumf %139, %141 : vector<8x1xf32>
    %143 = arith.subf %139, %142 : vector<8x1xf32>
    %144 = math.exp %143 : vector<8x1xf32>
    %145 = vector.broadcast %142 : vector<8x1xf32> to vector<8x8xf32>
    %146 = arith.subf %137, %145 : vector<8x8xf32>
    %147 = math.exp %146 : vector<8x8xf32>
    %c3_81 = arith.constant 3 : index
    %c0_82 = arith.constant 0 : index
    %c0_83 = arith.constant 0 : index
    %148 = vector.load %arg13[%c3_81, %c0_82, %c0_83] : memref<4x8x1xf32, #tpu.memory_space<vmem>>, vector<1x8x1xf32>
    %149 = vector.shape_cast %148 : vector<1x8x1xf32> to vector<8x1xf32>
    %150 = arith.mulf %144, %149 : vector<8x1xf32>
    %cst_84 = arith.constant dense<0.000000e+00> : vector<8xf32>
    %151 = vector.multi_reduction <add>, %147, %cst_84 [1] : vector<8x8xf32> to vector<8xf32>
    %152 = vector.shape_cast %151 : vector<8xf32> to vector<8x1xf32>
    %153 = arith.addf %150, %152 : vector<8x1xf32>
    %c3_85 = arith.constant 3 : index
    %c0_86 = arith.constant 0 : index
    %c0_87 = arith.constant 0 : index
    %154 = vector.load %arg13[%c3_85, %c0_86, %c0_87] : memref<4x8x1xf32, #tpu.memory_space<vmem>>, vector<1x8x1xf32>
    %155 = vector.shape_cast %154 : vector<1x8x1xf32> to vector<8x1xf32>
    %156 = vector.shape_cast %153 : vector<8x1xf32> to vector<1x8x1xf32>
    tpu.vector_store %arg13[%c3_85, %c0_86, %c0_87], %156 {strides = array<i32>} : memref<4x8x1xf32, #tpu.memory_space<vmem>>, vector<1x8x1xf32>,
    %c3_88 = arith.constant 3 : index
    %c0_89 = arith.constant 0 : index
    %c0_90 = arith.constant 0 : index
    %157 = vector.load %arg14[%c3_88, %c0_89, %c0_90] : memref<4x8x8xf32, #tpu.memory_space<vmem>>, vector<1x8x8xf32>
    %158 = vector.shape_cast %157 : vector<1x8x8xf32> to vector<8x8xf32>
    %159 = vector.broadcast %144 : vector<8x1xf32> to vector<8x8xf32>
    %160 = arith.mulf %159, %158 : vector<8x8xf32>
    %161 = arith.truncf %147 : vector<8x8xf32> to vector<8x8xbf16>
    %cst_91 = arith.constant dense<0.000000e+00> : vector<8x8xf32>
    %162 = tpu.matmul %161, %136, %cst_91 {dimension_numbers = #tpu.dot_dimension_numbers<[1], [0], [0], [1], [0, 0, 1, 1], [], []>} : vector<8x8xbf16>, vector<8x8xbf16>, vector<8x8xf32> -> vector<8x8xf32>
    %163 = arith.addf %160, %162 : vector<8x8xf32>
    %c3_92 = arith.constant 3 : index
    %c0_93 = arith.constant 0 : index
    %c0_94 = arith.constant 0 : index
    %164 = vector.load %arg14[%c3_92, %c0_93, %c0_94] : memref<4x8x8xf32, #tpu.memory_space<vmem>>, vector<1x8x8xf32>
    %165 = vector.shape_cast %164 : vector<1x8x8xf32> to vector<8x8xf32>
    %166 = vector.shape_cast %163 : vector<8x8xf32> to vector<1x8x8xf32>
    tpu.vector_store %arg14[%c3_92, %c0_93, %c0_94], %166 {strides = array<i32>} : memref<4x8x8xf32, #tpu.memory_space<vmem>>, vector<1x8x8xf32>,
    %c3_95 = arith.constant 3 : index
    %c0_96 = arith.constant 0 : index
    %c0_97 = arith.constant 0 : index
    %167 = vector.load %arg12[%c3_95, %c0_96, %c0_97] : memref<4x8x1xf32, #tpu.memory_space<vmem>>, vector<1x8x1xf32>
    %168 = vector.shape_cast %167 : vector<1x8x1xf32> to vector<8x1xf32>
    %169 = vector.shape_cast %142 : vector<8x1xf32> to vector<1x8x1xf32>
    tpu.vector_store %arg12[%c3_95, %c0_96, %c0_97], %169 {strides = array<i32>} : memref<4x8x1xf32, #tpu.memory_space<vmem>>, vector<1x8x1xf32>,
    %c0_i32_98 = arith.constant 0 : i32
    %170 = arith.cmpi eq, %arg2, %c0_i32_98 : i32
    %171 = arith.extui %170 : i1 to i32
    %c0_i32_99 = arith.constant 0 : i32
    %172 = arith.cmpi ne, %171, %c0_i32_99 : i32
    scf.if %172 {
      %c0_100 = arith.constant 0 : index
      %c0_101 = arith.constant 0 : index
      %173 = vector.load %arg9[%c0_100, %c0_101] : memref<32x32xbf16, #tpu.memory_space<vmem>>, vector<32x32xbf16>
      %cst_102 = arith.constant 0.000000e+00 : f32
      %174 = vector.broadcast %cst_102 : f32 to vector<8x32xf32>
      %c0_103 = arith.constant 0 : index
      %c0_104 = arith.constant 0 : index
      %c0_105 = arith.constant 0 : index
      %175 = vector.load %arg14[%c0_103, %c0_104, %c0_105] : memref<4x8x8xf32, #tpu.memory_space<vmem>>, vector<1x8x8xf32>
      %176 = vector.shape_cast %175 : vector<1x8x8xf32> to vector<8x8xf32>
      %c0_106 = arith.constant 0 : index
      %c0_107 = arith.constant 0 : index
      %c0_108 = arith.constant 0 : index
      %177 = vector.load %arg13[%c0_106, %c0_107, %c0_108] : memref<4x8x1xf32, #tpu.memory_space<vmem>>, vector<1x8x1xf32>
      %178 = vector.shape_cast %177 : vector<1x8x1xf32> to vector<8x1xf32>
      %179 = tpu.reciprocal %178 {approx = true} : vector<8x1xf32> -> vector<8x1xf32>
      %180 = vector.broadcast %179 : vector<8x1xf32> to vector<8x8xf32>
      %181 = arith.mulf %176, %180 : vector<8x8xf32>
      %182 = arith.truncf %181 : vector<8x8xf32> to vector<8x8xbf16>
      %183 = vector.extract_strided_slice %173 {offsets = [0, 0], sizes = [8, 32], strides = [1, 1]} : vector<32x32xbf16> to vector<8x32xbf16>
      %cst_109 = arith.constant dense<0.000000e+00> : vector<8x32xf32>
      %184 = tpu.matmul %182, %183, %cst_109 {dimension_numbers = #tpu.dot_dimension_numbers<[1], [0], [0], [1], [0, 0, 1, 1], [], []>} : vector<8x8xbf16>, vector<8x32xbf16>, vector<8x32xf32> -> vector<8x32xf32>
      %185 = arith.addf %174, %184 : vector<8x32xf32>
      %c1_110 = arith.constant 1 : index
      %c0_111 = arith.constant 0 : index
      %c0_112 = arith.constant 0 : index
      %186 = vector.load %arg14[%c1_110, %c0_111, %c0_112] : memref<4x8x8xf32, #tpu.memory_space<vmem>>, vector<1x8x8xf32>
      %187 = vector.shape_cast %186 : vector<1x8x8xf32> to vector<8x8xf32>
      %c1_113 = arith.constant 1 : index
      %c0_114 = arith.constant 0 : index
      %c0_115 = arith.constant 0 : index
      %188 = vector.load %arg13[%c1_113, %c0_114, %c0_115] : memref<4x8x1xf32, #tpu.memory_space<vmem>>, vector<1x8x1xf32>
      %189 = vector.shape_cast %188 : vector<1x8x1xf32> to vector<8x1xf32>
      %190 = tpu.reciprocal %189 {approx = true} : vector<8x1xf32> -> vector<8x1xf32>
      %191 = vector.broadcast %190 : vector<8x1xf32> to vector<8x8xf32>
      %192 = arith.mulf %187, %191 : vector<8x8xf32>
      %193 = arith.truncf %192 : vector<8x8xf32> to vector<8x8xbf16>
      %194 = vector.extract_strided_slice %173 {offsets = [8, 0], sizes = [8, 32], strides = [1, 1]} : vector<32x32xbf16> to vector<8x32xbf16>
      %cst_116 = arith.constant dense<0.000000e+00> : vector<8x32xf32>
      %195 = tpu.matmul %193, %194, %cst_116 {dimension_numbers = #tpu.dot_dimension_numbers<[1], [0], [0], [1], [0, 0, 1, 1], [], []>} : vector<8x8xbf16>, vector<8x32xbf16>, vector<8x32xf32> -> vector<8x32xf32>
      %196 = arith.addf %185, %195 : vector<8x32xf32>
      %c2_117 = arith.constant 2 : index
      %c0_118 = arith.constant 0 : index
      %c0_119 = arith.constant 0 : index
      %197 = vector.load %arg14[%c2_117, %c0_118, %c0_119] : memref<4x8x8xf32, #tpu.memory_space<vmem>>, vector<1x8x8xf32>
      %198 = vector.shape_cast %197 : vector<1x8x8xf32> to vector<8x8xf32>
      %c2_120 = arith.constant 2 : index
      %c0_121 = arith.constant 0 : index
      %c0_122 = arith.constant 0 : index
      %199 = vector.load %arg13[%c2_120, %c0_121, %c0_122] : memref<4x8x1xf32, #tpu.memory_space<vmem>>, vector<1x8x1xf32>
      %200 = vector.shape_cast %199 : vector<1x8x1xf32> to vector<8x1xf32>
      %201 = tpu.reciprocal %200 {approx = true} : vector<8x1xf32> -> vector<8x1xf32>
      %202 = vector.broadcast %201 : vector<8x1xf32> to vector<8x8xf32>
      %203 = arith.mulf %198, %202 : vector<8x8xf32>
      %204 = arith.truncf %203 : vector<8x8xf32> to vector<8x8xbf16>
      %205 = vector.extract_strided_slice %173 {offsets = [16, 0], sizes = [8, 32], strides = [1, 1]} : vector<32x32xbf16> to vector<8x32xbf16>
      %cst_123 = arith.constant dense<0.000000e+00> : vector<8x32xf32>
      %206 = tpu.matmul %204, %205, %cst_123 {dimension_numbers = #tpu.dot_dimension_numbers<[1], [0], [0], [1], [0, 0, 1, 1], [], []>} : vector<8x8xbf16>, vector<8x32xbf16>, vector<8x32xf32> -> vector<8x32xf32>
      %207 = arith.addf %196, %206 : vector<8x32xf32>
      %c3_124 = arith.constant 3 : index
      %c0_125 = arith.constant 0 : index
      %c0_126 = arith.constant 0 : index
      %208 = vector.load %arg14[%c3_124, %c0_125, %c0_126] : memref<4x8x8xf32, #tpu.memory_space<vmem>>, vector<1x8x8xf32>
      %209 = vector.shape_cast %208 : vector<1x8x8xf32> to vector<8x8xf32>
      %c3_127 = arith.constant 3 : index
      %c0_128 = arith.constant 0 : index
      %c0_129 = arith.constant 0 : index
      %210 = vector.load %arg13[%c3_127, %c0_128, %c0_129] : memref<4x8x1xf32, #tpu.memory_space<vmem>>, vector<1x8x1xf32>
      %211 = vector.shape_cast %210 : vector<1x8x1xf32> to vector<8x1xf32>
      %212 = tpu.reciprocal %211 {approx = true} : vector<8x1xf32> -> vector<8x1xf32>
      %213 = vector.broadcast %212 : vector<8x1xf32> to vector<8x8xf32>
      %214 = arith.mulf %209, %213 : vector<8x8xf32>
      %215 = arith.truncf %214 : vector<8x8xf32> to vector<8x8xbf16>
      %216 = vector.extract_strided_slice %173 {offsets = [24, 0], sizes = [8, 32], strides = [1, 1]} : vector<32x32xbf16> to vector<8x32xbf16>
      %cst_130 = arith.constant dense<0.000000e+00> : vector<8x32xf32>
      %217 = tpu.matmul %215, %216, %cst_130 {dimension_numbers = #tpu.dot_dimension_numbers<[1], [0], [0], [1], [0, 0, 1, 1], [], []>} : vector<8x8xbf16>, vector<8x32xbf16>, vector<8x32xf32> -> vector<8x32xf32>
      %218 = arith.addf %207, %217 : vector<8x32xf32>
      %c0_131 = arith.constant 0 : index
      %c0_132 = arith.constant 0 : index
      %c0_133 = arith.constant 0 : index
      %219 = vector.load %arg10[%c0_131, %c0_132, %c0_133] : memref<1x8x32xf32, #tpu.memory_space<vmem>>, vector<1x8x32xf32>
      %220 = vector.shape_cast %219 : vector<1x8x32xf32> to vector<8x32xf32>
      %221 = vector.shape_cast %218 : vector<8x32xf32> to vector<1x8x32xf32>
      tpu.vector_store %arg10[%c0_131, %c0_132, %c0_133], %221 {strides = array<i32>} : memref<1x8x32xf32, #tpu.memory_space<vmem>>, vector<1x8x32xf32>,
    } else {
    }
    return
  }
  func.func @transform_0(%arg0: i32, %arg1: i32, %arg2: i32) -> (i32, i32, i32) {
    %c0_i32 = arith.constant 0 : i32
    %c0_i32_0 = arith.constant 0 : i32
    return %arg0, %arg1, %c0_i32 : i32, i32, i32
  }
  func.func @transform_1(%arg0: i32, %arg1: i32, %arg2: i32) -> (i32, i32, i32) {
    %c0_i32 = arith.constant 0 : i32
    %c0_i32_0 = arith.constant 0 : i32
    return %arg0, %arg2, %c0_i32 : i32, i32, i32
  }
  func.func @transform_2(%arg0: i32, %arg1: i32, %arg2: i32) -> (i32, i32, i32) {
    %c0_i32 = arith.constant 0 : i32
    %c0_i32_0 = arith.constant 0 : i32
    return %arg0, %arg2, %c0_i32 : i32, i32, i32
  }
  func.func @transform_3(%arg0: i32, %arg1: i32, %arg2: i32) -> (i32, i32) {
    %c0_i32 = arith.constant 0 : i32
    %c0_i32_0 = arith.constant 0 : i32
    %c0_i32_1 = arith.constant 0 : i32
    return %c0_i32, %c0_i32_0 : i32, i32
  }
  func.func @transform_4(%arg0: i32, %arg1: i32, %arg2: i32) -> (i32, i32) {
    %c0_i32 = arith.constant 0 : i32
    %c0_i32_0 = arith.constant 0 : i32
    %c0_i32_1 = arith.constant 0 : i32
    return %c0_i32, %c0_i32_0 : i32, i32
  }
  func.func @transform_5(%arg0: i32, %arg1: i32, %arg2: i32) -> (i32, i32) {
    %c0_i32 = arith.constant 0 : i32
    %c0_i32_0 = arith.constant 0 : i32
    %c0_i32_1 = arith.constant 0 : i32
    return %c0_i32, %c0_i32_0 : i32, i32
  }
  func.func @transform_6(%arg0: i32, %arg1: i32, %arg2: i32) -> (i32, i32) {
    %c0_i32 = arith.constant 0 : i32
    %c0_i32_0 = arith.constant 0 : i32
    %c0_i32_1 = arith.constant 0 : i32
    return %c0_i32, %c0_i32_0 : i32, i32
  }
  func.func @transform_7(%arg0: i32, %arg1: i32, %arg2: i32) -> (i32, i32, i32) {
    %c0_i32 = arith.constant 0 : i32
    %c0_i32_0 = arith.constant 0 : i32
    return %arg0, %arg1, %c0_i32 : i32, i32, i32
  }
}

</mosaic_0001>

<llo_original>
// kernel: tpu_custom_call.1
$region0: #{tpu_custom_call.1}
  #allocation0 [shape = 'u32[]', space=smem, size = 0x4, offset = 0x4, fixed_abs, tag = 'smem constant byte address 0x4 - core index']
  #allocation1 [shape = 'u32[72,128]{1,0:T(1,128)}', space=vmem, size = 0x9000, scoped, tag = 'internal scratch']
  #allocation2 [shape = 'f32[8,32]{1,0:T(8,128)}', space=vmem, size = 0x1000, scoped, tag = 'scratch operand']
  #allocation3 [shape = 'f32[4,8,1]{2,1,0:T(8,128)}', space=vmem, size = 0x4000, scoped, tag = 'scratch operand']
  #allocation4 [shape = 'f32[4,8,1]{2,1,0:T(8,128)}', space=vmem, size = 0x4000, scoped, tag = 'scratch operand']
  #allocation5 [shape = 'f32[4,8,8]{2,1,0:T(8,128)}', space=vmem, size = 0x4000, scoped, tag = 'scratch operand']
  %s0 = inlined_call_operand.hbm [shape: f32[2,8,32], index: 0, kind: input, shape index: {}]
  %s1 = inlined_call_operand.hbm [shape: f32[2,8,32], index: 1, kind: input, shape index: {}]
  %s2 = inlined_call_operand.hbm [shape: f32[2,8,32], index: 2, kind: input, shape index: {}]
  %s3 = inlined_call_operand.hbm [shape: bf16[32,32], index: 3, kind: input, shape index: {}]
  %s4 = inlined_call_operand.hbm [shape: bf16[32,32], index: 4, kind: input, shape index: {}]
  %s5 = inlined_call_operand.hbm [shape: bf16[32,32], index: 5, kind: input, shape index: {}]
  %s6 = inlined_call_operand.hbm [shape: bf16[32,32], index: 6, kind: input, shape index: {}]
  %s7 = inlined_call_operand.hbm [shape: f32[2,8,32], index: 7, kind: output, shape index: {}]
  %s8 = sld [smem:[#allocation0]]
  $region97: #{tpu_custom_call.1} parent=0
    _
  %s10 = ssub.s32 1, %s8
  %s11 = scalar_select 0, %s10, %s8
  $region1: #{tpu_custom_call.1} parent=0
    #allocation6 [shape = 'u8[8192]{0}', space=vmem, size = 0x2000, scoped, tag = 'input window, operand 0']
    #allocation7 [shape = 's32[2]{0}', space=sflag, size = 0x8, scoped, tag = 'scoped memory for tpu_custom_call.1']
    #allocation8 [shape = 's32[2]{0}', space=sflag, size = 0x8, scoped, tag = 'scoped memory for tpu_custom_call.1']
    #allocation9 [shape = 'u8[8192]{0}', space=vmem, size = 0x2000, scoped, tag = 'input window, operand 1']
    #allocation10 [shape = 's32[2]{0}', space=sflag, size = 0x8, scoped, tag = 'scoped memory for tpu_custom_call.1']
    #allocation11 [shape = 'u8[8192]{0}', space=vmem, size = 0x2000, scoped, tag = 'input window, operand 2']
    #allocation12 [shape = 'u8[8192]{0}', space=vmem, size = 0x2000, scoped, tag = 'input window, operand 3, single buffered']
    #allocation13 [shape = 's32[1]{0}', space=sflag, size = 0x4, scoped, tag = 'scoped memory for tpu_custom_call.1']
    #allocation14 [shape = 'u8[8192]{0}', space=vmem, size = 0x2000, scoped, tag = 'input window, operand 4, single buffered']
    #allocation15 [shape = 'u8[8192]{0}', space=vmem, size = 0x2000, scoped, tag = 'input window, operand 5, single buffered']
    #allocation16 [shape = 's32[1]{0}', space=sflag, size = 0x4, scoped, tag = 'scoped memory for tpu_custom_call.1']
    #allocation17 [shape = 'u8[8192]{0}', space=vmem, size = 0x2000, scoped, tag = 'input window, operand 6, single buffered']
    #allocation18 [shape = 'u8[8192]{0}', space=vmem, size = 0x2000, scoped, tag = 'output window, operand 0']
    %12 = vsyncpa [#allocation7], 0
    %s13 = scalar_lea.sflag [#allocation7], 1
    %14 = vsyncpa %s13, 0
    %15 = vsyncpa [#allocation10], 0
    %s16 = scalar_lea.sflag [#allocation10], 1
    %17 = vsyncpa %s16, 0
    %18 = vsyncpa [#allocation13], 0
    %19 = vsyncpa [#allocation16], 0
    %20 = vsyncpa [#allocation8], 0
    %s21 = scalar_lea.sflag [#allocation8], 1
    %22 = vsyncpa %s21, 0
    loop: start=0, step=1, limit=4
    $region2: #{tpu_custom_call.1} parent=1 // loop_pre_header
      _
    $region3: #{tpu_custom_call.1} parent=1 // loop_header
      %s24 = sphi 0, %s28
      %p25 = scmp.ge.s32.totalorder %s24, 4
      %s31 = sphi 0, %s50
      %s32 = sphi 0, %s46
      %s33 = sphi 0, %s42
      %s34 = sphi 0, %s31
      %s35 = sphi 0, %s32
      %s36 = sphi 0, %s33
      %s37 = sphi 0, %s34
      %s38 = sphi 0, %s35
      %s39 = sphi 0, %s36
      %s55 = sphi 0, %s57
      %s58 = sphi 0, %s55
      %s59 = sphi 0, %s58
      %s75 = sphi 0, %s59
      %s83 = sphi 0, %s85
      %s86 = sphi 0, %s83
      %s87 = sphi 0, %s86
      %s103 = sphi 0, %s87
      %s111 = sphi 0, %s113
      %s114 = sphi 0, %s111
      %s115 = sphi 0, %s114
      %s131 = sphi 0, %s115
      %s135 = sphi 0, %s135
      %s137 = sphi 0, %s135
      %s138 = sphi 0, %s137
      %s152 = sphi 0, %s138
      %s156 = sphi 0, %s156
      %s158 = sphi 0, %s156
      %s159 = sphi 0, %s158
      %s173 = sphi 0, %s159
      %s177 = sphi 0, %s177
      %s179 = sphi 0, %s177
      %s180 = sphi 0, %s179
      %s194 = sphi 0, %s180
      %s198 = sphi 0, %s198
      %s200 = sphi 0, %s198
      %s201 = sphi 0, %s200
      %s215 = sphi 0, %s201
      %s223 = sphi 0, %s225
      %s226 = sphi 0, %s223
      %s227 = sphi 0, %s226
      %s243 = sphi 0, %s227
    $region4: #{tpu_custom_call.1} parent=1 // loop_header_branch
      %27 = sbr.rel (%p25) target = $region8
    $region5: #{tpu_custom_call.1} parent=1 // loop_body
      %s29 = ssub.s32 %s24, 1
      %s30 = ssub.s32 %s24, 2
      %s40 = sadd.s32 1, %s33
      %p41 = scmp.ge.s32.totalorder %s40, 1
      %s42 = scalar_select %p41, 0, %s40
      %s43 = sadd.s32 1, %s32
      %s44 = scalar_select %p41, %s43, %s32
      %p45 = scmp.ge.s32.totalorder %s44, 1
      %s46 = scalar_select %p45, 0, %s44
      %s47 = sadd.s32 1, %s31
      %s48 = scalar_select %p45, %s47, %s31
      %p49 = scmp.ge.s32.totalorder %s48, 2
      %s50 = scalar_select %p49, 0, %s48
      %s51 = ssub.s32 %s31, %s50
      %s52 = ssub.s32 %s32, %s46
      %s53 = sor.u32 %s51, %s52
      %p54 = scmp.eq.s32.totalorder %s53, 0
      %s56 = sadd.s32 %s55, 1
      %s57 = scalar_select %p54, %s55, %s56
      %p60 = pneg %p54
      %p61 = scmp.eq.s32.totalorder %s24, 1
      %p62 = por %p60, %p61
      %p63 = scmp.ne.s32.totalorder %s55, %s58
      %p64 = scmp.eq.s32.totalorder %s24, 0
      %p65 = por %p63, %p64
      %p66 = scmp.ne.s32.totalorder %s55, %s58
      %p67 = scmp.eq.s32.totalorder %s29, 1
      %p68 = por %p66, %p67
      %p69 = scmp.ne.s32.totalorder %s58, %s59
      %p70 = scmp.eq.s32.totalorder %s29, 0
      %p71 = por %p69, %p70
      %p72 = scmp.ne.s32.totalorder %s58, %s59
      %p73 = scmp.eq.s32.totalorder %s30, 1
      %p74 = por %p72, %p73
      %p76 = scmp.ne.s32.totalorder %s59, %s75
      %p77 = scmp.eq.s32.totalorder %s30, 0
      %p78 = por %p76, %p77
      %s79 = ssub.s32 %s31, %s50
      %s80 = ssub.s32 %s33, %s42
      %s81 = sor.u32 %s79, %s80
      %p82 = scmp.eq.s32.totalorder %s81, 0
      %s84 = sadd.s32 %s83, 1
      %s85 = scalar_select %p82, %s83, %s84
      %p88 = pneg %p82
      %p89 = scmp.eq.s32.totalorder %s24, 1
      %p90 = por %p88, %p89
      %p91 = scmp.ne.s32.totalorder %s83, %s86
      %p92 = scmp.eq.s32.totalorder %s24, 0
      %p93 = por %p91, %p92
      %p94 = scmp.ne.s32.totalorder %s83, %s86
      %p95 = scmp.eq.s32.totalorder %s29, 1
      %p96 = por %p94, %p95
      %p97 = scmp.ne.s32.totalorder %s86, %s87
      %p98 = scmp.eq.s32.totalorder %s29, 0
      %p99 = por %p97, %p98
      %p100 = scmp.ne.s32.totalorder %s86, %s87
      %p101 = scmp.eq.s32.totalorder %s30, 1
      %p102 = por %p100, %p101
      %p104 = scmp.ne.s32.totalorder %s87, %s103
      %p105 = scmp.eq.s32.totalorder %s30, 0
      %p106 = por %p104, %p105
      %s107 = ssub.s32 %s31, %s50
      %s108 = ssub.s32 %s33, %s42
      %s109 = sor.u32 %s107, %s108
      %p110 = scmp.eq.s32.totalorder %s109, 0
      %s112 = sadd.s32 %s111, 1
      %s113 = scalar_select %p110, %s111, %s112
      %p116 = pneg %p110
      %p117 = scmp.eq.s32.totalorder %s24, 1
      %p118 = por %p116, %p117
      %p119 = scmp.ne.s32.totalorder %s111, %s114
      %p120 = scmp.eq.s32.totalorder %s24, 0
      %p121 = por %p119, %p120
      %p122 = scmp.ne.s32.totalorder %s111, %s114
      %p123 = scmp.eq.s32.totalorder %s29, 1
      %p124 = por %p122, %p123
      %p125 = scmp.ne.s32.totalorder %s114, %s115
      %p126 = scmp.eq.s32.totalorder %s29, 0
      %p127 = por %p125, %p126
      %p128 = scmp.ne.s32.totalorder %s114, %s115
      %p129 = scmp.eq.s32.totalorder %s30, 1
      %p130 = por %p128, %p129
      %p132 = scmp.ne.s32.totalorder %s115, %s131
      %p133 = scmp.eq.s32.totalorder %s30, 0
      %p134 = por %p132, %p133
      %s136 = sadd.s32 %s135, 1
      %p139 = scmp.eq.s32.totalorder %s24, 1
      %p140 = scmp.ne.s32.totalorder %s135, %s137
      %p141 = scmp.eq.s32.totalorder %s24, 0
      %p142 = por %p140, %p141
      %p143 = scmp.ne.s32.totalorder %s135, %s137
      %p144 = scmp.eq.s32.totalorder %s29, 1
      %p145 = por %p143, %p144
      %p146 = scmp.ne.s32.totalorder %s137, %s138
      %p147 = scmp.eq.s32.totalorder %s29, 0
      %p148 = por %p146, %p147
      %p149 = scmp.ne.s32.totalorder %s137, %s138
      %p150 = scmp.eq.s32.totalorder %s30, 1
      %p151 = por %p149, %p150
      %p153 = scmp.ne.s32.totalorder %s138, %s152
      %p154 = scmp.eq.s32.totalorder %s30, 0
      %p155 = por %p153, %p154
      %s157 = sadd.s32 %s156, 1
      %p160 = scmp.eq.s32.totalorder %s24, 1
      %p161 = scmp.ne.s32.totalorder %s156, %s158
      %p162 = scmp.eq.s32.totalorder %s24, 0
      %p163 = por %p161, %p162
      %p164 = scmp.ne.s32.totalorder %s156, %s158
      %p165 = scmp.eq.s32.totalorder %s29, 1
      %p166 = por %p164, %p165
      %p167 = scmp.ne.s32.totalorder %s158, %s159
      %p168 = scmp.eq.s32.totalorder %s29, 0
      %p169 = por %p167, %p168
      %p170 = scmp.ne.s32.totalorder %s158, %s159
      %p171 = scmp.eq.s32.totalorder %s30, 1
      %p172 = por %p170, %p171
      %p174 = scmp.ne.s32.totalorder %s159, %s173
      %p175 = scmp.eq.s32.totalorder %s30, 0
      %p176 = por %p174, %p175
      %s178 = sadd.s32 %s177, 1
      %p181 = scmp.eq.s32.totalorder %s24, 1
      %p182 = scmp.ne.s32.totalorder %s177, %s179
      %p183 = scmp.eq.s32.totalorder %s24, 0
      %p184 = por %p182, %p183
      %p185 = scmp.ne.s32.totalorder %s177, %s179
      %p186 = scmp.eq.s32.totalorder %s29, 1
      %p187 = por %p185, %p186
      %p188 = scmp.ne.s32.totalorder %s179, %s180
      %p189 = scmp.eq.s32.totalorder %s29, 0
      %p190 = por %p188, %p189
      %p191 = scmp.ne.s32.totalorder %s179, %s180
      %p192 = scmp.eq.s32.totalorder %s30, 1
      %p193 = por %p191, %p192
      %p195 = scmp.ne.s32.totalorder %s180, %s194
      %p196 = scmp.eq.s32.totalorder %s30, 0
      %p197 = por %p195, %p196
      %s199 = sadd.s32 %s198, 1
      %p202 = scmp.eq.s32.totalorder %s24, 1
      %p203 = scmp.ne.s32.totalorder %s198, %s200
      %p204 = scmp.eq.s32.totalorder %s24, 0
      %p205 = por %p203, %p204
      %p206 = scmp.ne.s32.totalorder %s198, %s200
      %p207 = scmp.eq.s32.totalorder %s29, 1
      %p208 = por %p206, %p207
      %p209 = scmp.ne.s32.totalorder %s200, %s201
      %p210 = scmp.eq.s32.totalorder %s29, 0
      %p211 = por %p209, %p210
      %p212 = scmp.ne.s32.totalorder %s200, %s201
      %p213 = scmp.eq.s32.totalorder %s30, 1
      %p214 = por %p212, %p213
      %p216 = scmp.ne.s32.totalorder %s201, %s215
      %p217 = scmp.eq.s32.totalorder %s30, 0
      %p218 = por %p216, %p217
      %s219 = ssub.s32 %s31, %s50
      %s220 = ssub.s32 %s32, %s46
      %s221 = sor.u32 %s219, %s220
      %p222 = scmp.eq.s32.totalorder %s221, 0
      %s224 = sadd.s32 %s223, 1
      %s225 = scalar_select %p222, %s223, %s224
      %p228 = pneg %p222
      %p229 = scmp.eq.s32.totalorder %s24, 1
      %p230 = por %p228, %p229
      %p231 = scmp.ne.s32.totalorder %s223, %s226
      %p232 = scmp.eq.s32.totalorder %s24, 0
      %p233 = por %p231, %p232
      %p234 = scmp.ne.s32.totalorder %s223, %s226
      %p235 = scmp.eq.s32.totalorder %s29, 1
      %p236 = por %p234, %p235
      %p237 = scmp.ne.s32.totalorder %s226, %s227
      %p238 = scmp.eq.s32.totalorder %s29, 0
      %p239 = por %p237, %p238
      %p240 = scmp.ne.s32.totalorder %s226, %s227
      %p241 = scmp.eq.s32.totalorder %s30, 1
      %p242 = por %p240, %p241
      %p244 = scmp.ne.s32.totalorder %s227, %s243
      %p245 = scmp.eq.s32.totalorder %s30, 0
      %p246 = por %p244, %p245
      %p247 = scmp.le.s32.totalorder 1, %s24
      %p248 = scmp.lt.s32.totalorder %s24, 3
      %p249 = pnand %p247, %p248
      %p250 = pneg %p249
      // Predicated region
      $region9: #{tpu_custom_call.1} parent=5 // pred_check
        _
      $region10: #{tpu_custom_call.1} parent=5 // pred_check_branch
        %252 = sbr.rel (%p249) target = $region12
      $region11: #{tpu_custom_call.1} parent=5 // pred_region
        %s253 = ssub.s32 %s24, 1
        // Predicated region
        $region13: #{tpu_custom_call.1} parent=11 // pred_check
          %p254 = pneg %p148
        $region14: #{tpu_custom_call.1} parent=11 // pred_check_branch
          %256 = sbr.rel (%p254) target = $region16
        $region15: #{tpu_custom_call.1} parent=11 // pred_region
          %258 = vsyncadd [#allocation13], 0
          %s259 = sshll.u32 %s3, 4
          %s260 = int_to_ptr.hbm [resolvable:$true] %s259
          %s261 = sshll.u32 [#allocation12], 4
          %s262 = int_to_ptr.vmem [resolvable:$true] %s261
          %267 = dma.hbm_to_vmem [thread:$0]  %s260, 256, %s262, [#allocation13], 64, 64, 4
        $region16: #{tpu_custom_call.1} parent=11 // pred_fallthru
          _
        // Predicated region
        $region17: #{tpu_custom_call.1} parent=11 // pred_check
          %p268 = pneg %p169
        $region18: #{tpu_custom_call.1} parent=11 // pred_check_branch
          %270 = sbr.rel (%p268) target = $region20
        $region19: #{tpu_custom_call.1} parent=11 // pred_region
          %272 = vsyncadd [#allocation13], 0
          %s273 = sshll.u32 %s4, 4
          %s274 = int_to_ptr.hbm [resolvable:$true] %s273
          %s275 = sshll.u32 [#allocation14], 4
          %s276 = int_to_ptr.vmem [resolvable:$true] %s275
          %281 = dma.hbm_to_vmem [thread:$0]  %s274, 256, %s276, [#allocation13], 64, 64, 4
        $region20: #{tpu_custom_call.1} parent=11 // pred_fallthru
          _
        // Predicated region
        $region21: #{tpu_custom_call.1} parent=11 // pred_check
          %p282 = pneg %p190
        $region22: #{tpu_custom_call.1} parent=11 // pred_check_branch
          %284 = sbr.rel (%p282) target = $region24
        $region23: #{tpu_custom_call.1} parent=11 // pred_region
          %286 = vsyncadd [#allocation16], 0
          %s287 = sshll.u32 %s5, 4
          %s288 = int_to_ptr.hbm [resolvable:$true] %s287
          %s289 = sshll.u32 [#allocation15], 4
          %s290 = int_to_ptr.vmem [resolvable:$true] %s289
          %295 = dma.hbm_to_vmem [thread:$0]  %s288, 256, %s290, [#allocation16], 64, 64, 4
        $region24: #{tpu_custom_call.1} parent=11 // pred_fallthru
          _
        // Predicated region
        $region25: #{tpu_custom_call.1} parent=11 // pred_check
          %p296 = pneg %p211
        $region26: #{tpu_custom_call.1} parent=11 // pred_check_branch
          %298 = sbr.rel (%p296) target = $region28
        $region27: #{tpu_custom_call.1} parent=11 // pred_region
          %300 = vsyncadd [#allocation16], 0
          %s301 = sshll.u32 %s6, 4
          %s302 = int_to_ptr.hbm [resolvable:$true] %s301
          %s303 = sshll.u32 [#allocation17], 4
          %s304 = int_to_ptr.vmem [resolvable:$true] %s303
          %309 = dma.hbm_to_vmem [thread:$0]  %s302, 256, %s304, [#allocation16], 64, 64, 4
        $region28: #{tpu_custom_call.1} parent=11 // pred_fallthru
          _
      $region12: #{tpu_custom_call.1} parent=5 // pred_fallthru
        _
      %p310 = scmp.lt.s32.totalorder %s24, 2
      // Predicated region
      $region29: #{tpu_custom_call.1} parent=5 // pred_check
        %p311 = pneg %p310
      $region30: #{tpu_custom_call.1} parent=5 // pred_check_branch
        %313 = sbr.rel (%p311) target = $region32
      $region31: #{tpu_custom_call.1} parent=5 // pred_region
        // Predicated region
        $region33: #{tpu_custom_call.1} parent=31 // pred_check
          %p314 = pneg %p65
        $region34: #{tpu_custom_call.1} parent=31 // pred_check_branch
          %316 = sbr.rel (%p314) target = $region36
        $region35: #{tpu_custom_call.1} parent=31 // pred_region
          %s317 = sand.u32 %s55, 1
          %s318 = scalar_lea.sflag [#allocation7], %s317
          %s319 = sand.u32 %s55, 1
          %s320 = smul.addr %s319, 8
          %s321 = scalar_lea.vmem [#allocation6], %s320
          %323 = vsyncadd %s318, 0
          %s324 = sadd.s32 %s32, %s31
          %s325 = smul.addr %s324, 8
          %s326 = scalar_lea.hbm %s0, %s325
          %s328 = sshll.u32 %s326, 4
          %s329 = int_to_ptr.hbm [resolvable:$true] %s328
          %s330 = sshll.u32 %s321, 4
          %s331 = int_to_ptr.vmem [resolvable:$true] %s330
          %333 = dma.hbm_to_vmem [thread:$0]  %s329, 128, %s331, %s318
        $region36: #{tpu_custom_call.1} parent=31 // pred_fallthru
          _
        // Predicated region
        $region37: #{tpu_custom_call.1} parent=31 // pred_check
          %p334 = pneg %p93
        $region38: #{tpu_custom_call.1} parent=31 // pred_check_branch
          %336 = sbr.rel (%p334) target = $region40
        $region39: #{tpu_custom_call.1} parent=31 // pred_region
          %s337 = sand.u32 %s24, 1
          %s338 = scalar_lea.sflag [#allocation10], %s337
          %s339 = sand.u32 %s83, 1
          %s340 = smul.addr %s339, 8
          %s341 = scalar_lea.vmem [#allocation9], %s340
          %343 = vsyncadd %s338, 0
          %s344 = sadd.s32 %s33, %s31
          %s345 = smul.addr %s344, 8
          %s346 = scalar_lea.hbm %s1, %s345
          %s348 = sshll.u32 %s346, 4
          %s349 = int_to_ptr.hbm [resolvable:$true] %s348
          %s350 = sshll.u32 %s341, 4
          %s351 = int_to_ptr.vmem [resolvable:$true] %s350
          %353 = dma.hbm_to_vmem [thread:$0]  %s349, 128, %s351, %s338
        $region40: #{tpu_custom_call.1} parent=31 // pred_fallthru
          _
        // Predicated region
        $region41: #{tpu_custom_call.1} parent=31 // pred_check
          %p354 = pneg %p121
        $region42: #{tpu_custom_call.1} parent=31 // pred_check_branch
          %356 = sbr.rel (%p354) target = $region44
        $region43: #{tpu_custom_call.1} parent=31 // pred_region
          %s357 = sand.u32 %s24, 1
          %s358 = scalar_lea.sflag [#allocation10], %s357
          %s359 = sand.u32 %s111, 1
          %s360 = smul.addr %s359, 8
          %s361 = scalar_lea.vmem [#allocation11], %s360
          %363 = vsyncadd %s358, 0
          %s364 = sadd.s32 %s33, %s31
          %s365 = smul.addr %s364, 8
          %s366 = scalar_lea.hbm %s2, %s365
          %s368 = sshll.u32 %s366, 4
          %s369 = int_to_ptr.hbm [resolvable:$true] %s368
          %s370 = sshll.u32 %s361, 4
          %s371 = int_to_ptr.vmem [resolvable:$true] %s370
          %373 = dma.hbm_to_vmem [thread:$0]  %s369, 128, %s371, %s358
        $region44: #{tpu_custom_call.1} parent=31 // pred_fallthru
          _
      $region32: #{tpu_custom_call.1} parent=5 // pred_fallthru
        _
      %p374 = scmp.le.s32.totalorder 1, %s24
      %p375 = scmp.lt.s32.totalorder %s24, 3
      %p376 = pnand %p374, %p375
      %p377 = pneg %p376
      // Predicated region
      $region45: #{tpu_custom_call.1} parent=5 // pred_check
        _
      $region46: #{tpu_custom_call.1} parent=5 // pred_check_branch
        %379 = sbr.rel (%p376) target = $region48
      $region47: #{tpu_custom_call.1} parent=5 // pred_region
        %s380 = ssub.s32 %s24, 1
        %s381 = sand.u32 %s58, 1
        %s382 = scalar_lea.sflag [#allocation7], %s381
        %s383 = sand.u32 %s58, 1
        %s384 = smul.addr %s383, 8
        %s385 = scalar_lea.vmem [#allocation6], %s384
        // Predicated region
        $region49: #{tpu_custom_call.1} parent=47 // pred_check
          %p386 = pneg %p71
        $region50: #{tpu_custom_call.1} parent=47 // pred_check_branch
          %388 = sbr.rel (%p386) target = $region52
        $region51: #{tpu_custom_call.1} parent=47 // pred_region
          %390 = dma.done %s382, 128
        $region52: #{tpu_custom_call.1} parent=47 // pred_fallthru
          _
        %s391 = sand.u32 %s29, 1
        %s392 = scalar_lea.sflag [#allocation10], %s391
        %s393 = sand.u32 %s86, 1
        %s394 = smul.addr %s393, 8
        %s395 = scalar_lea.vmem [#allocation9], %s394
        // Predicated region
        $region53: #{tpu_custom_call.1} parent=47 // pred_check
          %p396 = pneg %p99
        $region54: #{tpu_custom_call.1} parent=47 // pred_check_branch
          %398 = sbr.rel (%p396) target = $region56
        $region55: #{tpu_custom_call.1} parent=47 // pred_region
          %400 = dma.done %s392, 128
        $region56: #{tpu_custom_call.1} parent=47 // pred_fallthru
          _
        %s401 = sand.u32 %s29, 1
        %s402 = scalar_lea.sflag [#allocation10], %s401
        %s403 = sand.u32 %s114, 1
        %s404 = smul.addr %s403, 8
        %s405 = scalar_lea.vmem [#allocation11], %s404
        // Predicated region
        $region57: #{tpu_custom_call.1} parent=47 // pred_check
          %p406 = pneg %p127
        $region58: #{tpu_custom_call.1} parent=47 // pred_check_branch
          %408 = sbr.rel (%p406) target = $region60
        $region59: #{tpu_custom_call.1} parent=47 // pred_region
          %410 = dma.done %s402, 128
        $region60: #{tpu_custom_call.1} parent=47 // pred_fallthru
          _
        // Predicated region
        $region61: #{tpu_custom_call.1} parent=47 // pred_check
          %p411 = pneg %p148
        $region62: #{tpu_custom_call.1} parent=47 // pred_check_branch
          %413 = sbr.rel (%p411) target = $region64
        $region63: #{tpu_custom_call.1} parent=47 // pred_region
          %415 = dma.done [#allocation13], 256
        $region64: #{tpu_custom_call.1} parent=47 // pred_fallthru
          _
        // Predicated region
        $region65: #{tpu_custom_call.1} parent=47 // pred_check
          %p416 = pneg %p169
        $region66: #{tpu_custom_call.1} parent=47 // pred_check_branch
          %418 = sbr.rel (%p416) target = $region68
        $region67: #{tpu_custom_call.1} parent=47 // pred_region
          %420 = dma.done [#allocation13], 256
        $region68: #{tpu_custom_call.1} parent=47 // pred_fallthru
          _
        // Predicated region
        $region69: #{tpu_custom_call.1} parent=47 // pred_check
          %p421 = pneg %p190
        $region70: #{tpu_custom_call.1} parent=47 // pred_check_branch
          %423 = sbr.rel (%p421) target = $region72
        $region71: #{tpu_custom_call.1} parent=47 // pred_region
          %425 = dma.done [#allocation16], 256
        $region72: #{tpu_custom_call.1} parent=47 // pred_fallthru
          _
        // Predicated region
        $region73: #{tpu_custom_call.1} parent=47 // pred_check
          %p426 = pneg %p211
        $region74: #{tpu_custom_call.1} parent=47 // pred_check_branch
          %428 = sbr.rel (%p426) target = $region76
        $region75: #{tpu_custom_call.1} parent=47 // pred_region
          %430 = dma.done [#allocation16], 256
        $region76: #{tpu_custom_call.1} parent=47 // pred_fallthru
          _
        %s431 = sand.u32 %s58, 1
        %s432 = scalar_lea.sflag [#allocation7], %s431
        %s433 = sand.u32 %s58, 1
        %s434 = smul.addr %s433, 8
        %s435 = scalar_lea.vmem [#allocation6], %s434
        %p436 = pneg %p71
        %p437 = pneg %p68
        %s438 = sand.u32 %s29, 1
        %s439 = scalar_lea.sflag [#allocation10], %s438
        %s440 = sand.u32 %s86, 1
        %s441 = smul.addr %s440, 8
        %s442 = scalar_lea.vmem [#allocation9], %s441
        %p443 = pneg %p99
        %p444 = pneg %p96
        %s445 = sand.u32 %s29, 1
        %s446 = scalar_lea.sflag [#allocation10], %s445
        %s447 = sand.u32 %s114, 1
        %s448 = smul.addr %s447, 8
        %s449 = scalar_lea.vmem [#allocation11], %s448
        %p450 = pneg %p127
        %p451 = pneg %p124
        %p452 = pneg %p148
        %p453 = pneg %p145
        %p454 = pneg %p169
        %p455 = pneg %p166
        %p456 = pneg %p190
        %p457 = pneg %p187
        %p458 = pneg %p211
        %p459 = pneg %p208
        %p460 = pneg %p239
        %p461 = pneg %p236
        %s462 = sand.u32 %s226, 1
        %s463 = scalar_lea.sflag [#allocation8], %s462
        %s464 = sand.u32 %s226, 1
        %s465 = smul.addr %s464, 8
        %s466 = scalar_lea.vmem [#allocation18], %s465
        %p468 = scmp.eq.s32.totalorder %s36, 0
        // Predicated region
        $region77: #{tpu_custom_call.1} parent=47 // pred_check
          %p469 = pneg %p468
        $region78: #{tpu_custom_call.1} parent=47 // pred_check_branch
          %471 = sbr.rel (%p469) target = $region80
        $region79: #{tpu_custom_call.1} parent=47 // pred_region
          %v472 = vld [vmem:[%s385] sm:$0xff]
          %v473 = vpack.c.bf16 %v472, %v472
          %v474 = vld [vmem:[#allocation12] sm:$0xf]
          %v475 = vld [vmem:[#allocation12 + $0x4] sm:$0xf]
          %v476 = vld [vmem:[#allocation12 + $0x8] sm:$0xf]
          %v477 = vld [vmem:[#allocation12 + $0xc] sm:$0xf]
          %v482 = vunpack.c.l.b16 %v474
          %v483 = vunpack.c.l.b16 %v475
          %v484 = vunpack.c.l.b16 %v476
          %v485 = vunpack.c.l.b16 %v477
          %v486 = vpack.c.b16 %v483, %v482
          %v487 = vpack.c.b16 %v485, %v484
          %vm490 = vcmask 261120
          %v492 = vsel %vm490, %v473, 0
          %494 = vmatpush.bf16.msra.mxu0 0
          %495 = vmatpush.bf16.msra.mxu0 0
          %496 = vmatpush.bf16.msra.mxu0 0
          %497 = vmatpush.bf16.msra.mxu0 0
          %498 = vmatpush.bf16.msra.mxu0 0
          %499 = vmatpush.bf16.msra.mxu0 0
          %500 = vmatpush.bf16.msra.mxu0 %v487
          %501 = vmatpush.bf16.msra.mxu0 %v486
          %502 = vmatmul.bf16.gmra.mxu0 %v492
          %v503 = vpop.f32.mrf.mxu0
          %v504 = vadd.f32 0.0, %v503
          %v505 = vpop.f32.mrf.mxu0
          %506 = vdwg.mxu0
          %v507 = vmul.f32 %v504, 0.35355338
          %508 = vst.msk [vmem:[#allocation2] sm:$0xff] %vm490, %v507
          %vm509 = vcmask 7168
          %510 = vst.msk [vmem:[#allocation3] sm:$0xff] %vm509, -inf
          %511 = vst.msk [vmem:[#allocation3 + $0x8] sm:$0xff] %vm509, -inf
          %512 = vst.msk [vmem:[#allocation3 + $0x10] sm:$0xff] %vm509, -inf
          %513 = vst.msk [vmem:[#allocation3 + $0x18] sm:$0xff] %vm509, -inf
          %514 = vst.msk [vmem:[#allocation4] sm:$0xff] %vm509, 0.0
          %515 = vst.msk [vmem:[#allocation4 + $0x8] sm:$0xff] %vm509, 0.0
          %516 = vst.msk [vmem:[#allocation4 + $0x10] sm:$0xff] %vm509, 0.0
          %517 = vst.msk [vmem:[#allocation4 + $0x18] sm:$0xff] %vm509, 0.0
          %vm518 = vcmask 64512
          %519 = vst.msk [vmem:[#allocation5] sm:$0xff] %vm518, 0.0
          %520 = vst.msk [vmem:[#allocation5 + $0x8] sm:$0xff] %vm518, 0.0
          %521 = vst.msk [vmem:[#allocation5 + $0x10] sm:$0xff] %vm518, 0.0
          %522 = vst.msk [vmem:[#allocation5 + $0x18] sm:$0xff] %vm518, 0.0
        $region80: #{tpu_custom_call.1} parent=47 // pred_fallthru
          _
        %v523 = vld [vmem:[%s395] sm:$0xff]
        %v524 = vpack.c.bf16 %v523, %v523
        %v525 = vld [vmem:[#allocation14] sm:$0xf]
        %v526 = vld [vmem:[#allocation14 + $0x4] sm:$0xf]
        %v527 = vld [vmem:[#allocation14 + $0x8] sm:$0xf]
        %v528 = vld [vmem:[#allocation14 + $0xc] sm:$0xf]
        %v533 = vunpack.c.l.b16 %v525
        %v534 = vunpack.c.l.b16 %v526
        %v535 = vunpack.c.l.b16 %v527
        %v536 = vunpack.c.l.b16 %v528
        %v537 = vpack.c.b16 %v534, %v533
        %v538 = vpack.c.b16 %v536, %v535
        %vm541 = vcmask 261120
        %v543 = vsel %vm541, %v524, 0
        %545 = vmatpush.bf16.msra.mxu0 0
        %546 = vmatpush.bf16.msra.mxu0 0
        %547 = vmatpush.bf16.msra.mxu0 0
        %548 = vmatpush.bf16.msra.mxu0 0
        %549 = vmatpush.bf16.msra.mxu0 0
        %550 = vmatpush.bf16.msra.mxu0 0
        %551 = vmatpush.bf16.msra.mxu0 %v538
        %552 = vmatpush.bf16.msra.mxu0 %v537
        %553 = vmatmul.bf16.gmra.mxu0 %v543
        %v554 = vpop.f32.mrf.mxu0
        %v555 = vadd.f32 0.0, %v554
        %v556 = vpop.f32.mrf.mxu0
        %557 = vdwg.mxu0
        %v558 = vld [vmem:[%s405] sm:$0xff]
        %v559 = vpack.c.bf16 %v558, %v558
        %v560 = vld [vmem:[#allocation15] sm:$0xf]
        %v561 = vld [vmem:[#allocation15 + $0x4] sm:$0xf]
        %v562 = vld [vmem:[#allocation15 + $0x8] sm:$0xf]
        %v563 = vld [vmem:[#allocation15 + $0xc] sm:$0xf]
        %v568 = vunpack.c.l.b16 %v560
        %v569 = vunpack.c.l.b16 %v561
        %v570 = vunpack.c.l.b16 %v562
        %v571 = vunpack.c.l.b16 %v563
        %v572 = vpack.c.b16 %v569, %v568
        %v573 = vpack.c.b16 %v571, %v570
        %v577 = vsel %vm541, %v559, 0
        %579 = vmatpush.bf16.msra.mxu0 0
        %580 = vmatpush.bf16.msra.mxu0 0
        %581 = vmatpush.bf16.msra.mxu0 0
        %582 = vmatpush.bf16.msra.mxu0 0
        %583 = vmatpush.bf16.msra.mxu0 0
        %584 = vmatpush.bf16.msra.mxu0 0
        %585 = vmatpush.bf16.msra.mxu0 %v573
        %586 = vmatpush.bf16.msra.mxu0 %v572
        %587 = vmatmul.bf16.gmra.mxu0 %v577
        %v588 = vpop.f32.mrf.mxu0
        %v589 = vadd.f32 0.0, %v588
        %v590 = vpop.f32.mrf.mxu0
        %591 = vdwg.mxu0
        %v592 = vld [vmem:[#allocation2] sm:$0xff]
        %v593 = vpack.c.bf16 %v592, %v592
        %v594 = vpack.c.bf16 %v555, %v555
        %v595 = vpack.c.bf16 %v589, %v589
        %vm596 = vcmask 64512
        %v598 = vsel %vm596, %v593, 0
        %v601 = vsel %vm596, %v594, 0
        %603 = vmatpush.bf16.xpose.msra.mxu0 0
        %604 = vmatpush.bf16.xpose.msra.mxu0 0
        %605 = vmatpush.bf16.xpose.msra.mxu0 0
        %606 = vmatpush.bf16.xpose.msra.mxu0 0
        %607 = vmatpush.bf16.xpose.msra.mxu0 0
        %608 = vmatpush.bf16.xpose.msra.mxu0 0
        %609 = vmatpush.bf16.xpose.msra.mxu0 0
        %610 = vmatpush.bf16.xpose.msra.mxu0 %v601
        %611 = vmatmul.bf16.gmra.mxu0 %v598
        %v612 = vpop.f32.mrf.mxu0
        %v613 = vadd.f32 0.0, %v612
        %v614 = vpop.f32.mrf.mxu0
        %615 = vdwg.mxu0
        %v616 = vld [vmem:[#allocation3] sm:$0xff]
        %v617 = vsel %vm596, %v613, -inf
        %618 = vmax.xlane.f32.xlu0 %v617
        %v619 = vpop.xlane.xlu0 %618
        %v620 = vmax.f32 %v616, %v619
        %v621 = vsub.f32 %v616, %v620
        %v622 = vmul.f32 %v621, 1.442695
        %v623 = vpow.pop %v622
        %625 = vset.pattern.permute.xlu0 0
        %626 = vperm.xlu0 %625, %v620
        %v627 = vpop.permute.xlu0 %626
        %v629 = vsub.f32 %v613, %v627
        %v630 = vmul.f32 %v629, 1.442695
        %v631 = vpow.pop %v630
        %v632 = vld [vmem:[#allocation4] sm:$0xff]
        %v633 = vmul.f32 %v623, %v632
        %v634 = vsel %vm596, %v631, 0.0
        %635 = vadd.xlane.f32.xlu0 %v634
        %v636 = vpop.xlane.xlu0 %635
        %v637 = vadd.f32 %v633, %v636
        %vm638 = vcmask 7168
        %639 = vst.msk [vmem:[#allocation4] sm:$0xff] %vm638, %v637
        %v640 = vld [vmem:[#allocation5] sm:$0xff]
        %642 = vset.pattern.permute.xlu0 0
        %643 = vperm.xlu0 %642, %v623
        %v644 = vpop.permute.xlu0 %643
        %v646 = vmul.f32 %v644, %v640
        %v647 = vpack.c.bf16 %v631, %v631
        %v649 = vsel %vm596, %v647, 0
        %vm651 = vcmask 1043456
        %v653 = vsel %vm651, %v595, 0
        %655 = vmatpush.bf16.msra.mxu0 0
        %656 = vmatpush.bf16.msra.mxu0 0
        %657 = vmatpush.bf16.msra.mxu0 0
        %658 = vmatpush.bf16.msra.mxu0 0
        %659 = vmatpush.bf16.msra.mxu0 0
        %660 = vmatpush.bf16.msra.mxu0 0
        %661 = vmatpush.bf16.msra.mxu0 0
        %662 = vmatpush.bf16.msra.mxu0 %v653
        %663 = vmatmul.bf16.gmra.mxu0 %v649
        %v664 = vpop.f32.mrf.mxu0
        %v665 = vadd.f32 0.0, %v664
        %v666 = vpop.f32.mrf.mxu0
        %667 = vdwg.mxu0
        %v668 = vadd.f32 %v646, %v665
        %669 = vst.msk [vmem:[#allocation5] sm:$0xff] %vm596, %v668
        %670 = vst.msk [vmem:[#allocation3] sm:$0xff] %vm638, %v620
        %672 = vrot.lane.b32.xlu0 %v593, 120
        %v673 = vpop.permute.xlu0 %672
        %675 = vrot.lane.b32.xlu0 %v594, 120
        %v676 = vpop.permute.xlu0 %675
        %v678 = vsel %vm596, %v673, 0
        %v681 = vsel %vm596, %v676, 0
        %683 = vmatpush.bf16.xpose.msra.mxu0 0
        %684 = vmatpush.bf16.xpose.msra.mxu0 0
        %685 = vmatpush.bf16.xpose.msra.mxu0 0
        %686 = vmatpush.bf16.xpose.msra.mxu0 0
        %687 = vmatpush.bf16.xpose.msra.mxu0 0
        %688 = vmatpush.bf16.xpose.msra.mxu0 0
        %689 = vmatpush.bf16.xpose.msra.mxu0 0
        %690 = vmatpush.bf16.xpose.msra.mxu0 %v681
        %691 = vmatmul.bf16.gmra.mxu0 %v678
        %v692 = vpop.f32.mrf.mxu0
        %v693 = vadd.f32 0.0, %v692
        %v694 = vpop.f32.mrf.mxu0
        %695 = vdwg.mxu0
        %s696 = scalar_lea.vmem [#allocation3], 8
        %v697 = vld [vmem:[%s696] sm:$0xff]
        %v698 = vsel %vm596, %v693, -inf
        %699 = vmax.xlane.f32.xlu0 %v698
        %v700 = vpop.xlane.xlu0 %699
        %v701 = vmax.f32 %v697, %v700
        %v702 = vsub.f32 %v697, %v701
        %v703 = vmul.f32 %v702, 1.442695
        %v704 = vpow.pop %v703
        %706 = vset.pattern.permute.xlu0 0
        %707 = vperm.xlu0 %706, %v701
        %v708 = vpop.permute.xlu0 %707
        %v710 = vsub.f32 %v693, %v708
        %v711 = vmul.f32 %v710, 1.442695
        %v712 = vpow.pop %v711
        %s713 = scalar_lea.vmem [#allocation4], 8
        %v714 = vld [vmem:[%s713] sm:$0xff]
        %v715 = vmul.f32 %v704, %v714
        %v716 = vsel %vm596, %v712, 0.0
        %717 = vadd.xlane.f32.xlu0 %v716
        %v718 = vpop.xlane.xlu0 %717
        %v719 = vadd.f32 %v715, %v718
        %720 = vst.msk [vmem:[%s713] sm:$0xff] %vm638, %v719
        %s721 = scalar_lea.vmem [#allocation5], 8
        %v722 = vld [vmem:[%s721] sm:$0xff]
        %724 = vset.pattern.permute.xlu0 0
        %725 = vperm.xlu0 %724, %v704
        %v726 = vpop.permute.xlu0 %725
        %v728 = vmul.f32 %v726, %v722
        %v729 = vpack.c.bf16 %v712, %v712
        %731 = vrot.lane.b32.xlu0 %v595, 120
        %v732 = vpop.permute.xlu0 %731
        %v734 = vsel %vm596, %v729, 0
        %v737 = vsel %vm651, %v732, 0
        %739 = vmatpush.bf16.msra.mxu0 0
        %740 = vmatpush.bf16.msra.mxu0 0
        %741 = vmatpush.bf16.msra.mxu0 0
        %742 = vmatpush.bf16.msra.mxu0 0
        %743 = vmatpush.bf16.msra.mxu0 0
        %744 = vmatpush.bf16.msra.mxu0 0
        %745 = vmatpush.bf16.msra.mxu0 0
        %746 = vmatpush.bf16.msra.mxu0 %v737
        %747 = vmatmul.bf16.gmra.mxu0 %v734
        %v748 = vpop.f32.mrf.mxu0
        %v749 = vadd.f32 0.0, %v748
        %v750 = vpop.f32.mrf.mxu0
        %751 = vdwg.mxu0
        %v752 = vadd.f32 %v728, %v749
        %753 = vst.msk [vmem:[%s721] sm:$0xff] %vm596, %v752
        %754 = vst.msk [vmem:[%s696] sm:$0xff] %vm638, %v701
        %755 = vrot.lane.b32.xlu0 %v593, 112
        %v756 = vpop.permute.xlu0 %755
        %757 = vrot.lane.b32.xlu0 %v594, 112
        %v758 = vpop.permute.xlu0 %757
        %v760 = vsel %vm596, %v756, 0
        %v763 = vsel %vm596, %v758, 0
        %765 = vmatpush.bf16.xpose.msra.mxu0 0
        %766 = vmatpush.bf16.xpose.msra.mxu0 0
        %767 = vmatpush.bf16.xpose.msra.mxu0 0
        %768 = vmatpush.bf16.xpose.msra.mxu0 0
        %769 = vmatpush.bf16.xpose.msra.mxu0 0
        %770 = vmatpush.bf16.xpose.msra.mxu0 0
        %771 = vmatpush.bf16.xpose.msra.mxu0 0
        %772 = vmatpush.bf16.xpose.msra.mxu0 %v763
        %773 = vmatmul.bf16.gmra.mxu0 %v760
        %v774 = vpop.f32.mrf.mxu0
        %v775 = vadd.f32 0.0, %v774
        %v776 = vpop.f32.mrf.mxu0
        %777 = vdwg.mxu0
        %s778 = scalar_lea.vmem [#allocation3], 16
        %v779 = vld [vmem:[%s778] sm:$0xff]
        %v780 = vsel %vm596, %v775, -inf
        %781 = vmax.xlane.f32.xlu0 %v780
        %v782 = vpop.xlane.xlu0 %781
        %v783 = vmax.f32 %v779, %v782
        %v784 = vsub.f32 %v779, %v783
        %v785 = vmul.f32 %v784, 1.442695
        %v786 = vpow.pop %v785
        %788 = vset.pattern.permute.xlu0 0
        %789 = vperm.xlu0 %788, %v783
        %v790 = vpop.permute.xlu0 %789
        %v792 = vsub.f32 %v775, %v790
        %v793 = vmul.f32 %v792, 1.442695
        %v794 = vpow.pop %v793
        %s795 = scalar_lea.vmem [#allocation4], 16
        %v796 = vld [vmem:[%s795] sm:$0xff]
        %v797 = vmul.f32 %v786, %v796
        %v798 = vsel %vm596, %v794, 0.0
        %799 = vadd.xlane.f32.xlu0 %v798
        %v800 = vpop.xlane.xlu0 %799
        %v801 = vadd.f32 %v797, %v800
        %802 = vst.msk [vmem:[%s795] sm:$0xff] %vm638, %v801
        %s803 = scalar_lea.vmem [#allocation5], 16
        %v804 = vld [vmem:[%s803] sm:$0xff]
        %806 = vset.pattern.permute.xlu0 0
        %807 = vperm.xlu0 %806, %v786
        %v808 = vpop.permute.xlu0 %807
        %v810 = vmul.f32 %v808, %v804
        %v811 = vpack.c.bf16 %v794, %v794
        %812 = vrot.lane.b32.xlu0 %v595, 112
        %v813 = vpop.permute.xlu0 %812
        %v815 = vsel %vm596, %v811, 0
        %v818 = vsel %vm651, %v813, 0
        %820 = vmatpush.bf16.msra.mxu0 0
        %821 = vmatpush.bf16.msra.mxu0 0
        %822 = vmatpush.bf16.msra.mxu0 0
        %823 = vmatpush.bf16.msra.mxu0 0
        %824 = vmatpush.bf16.msra.mxu0 0
        %825 = vmatpush.bf16.msra.mxu0 0
        %826 = vmatpush.bf16.msra.mxu0 0
        %827 = vmatpush.bf16.msra.mxu0 %v818
        %828 = vmatmul.bf16.gmra.mxu0 %v815
        %v829 = vpop.f32.mrf.mxu0
        %v830 = vadd.f32 0.0, %v829
        %v831 = vpop.f32.mrf.mxu0
        %832 = vdwg.mxu0
        %v833 = vadd.f32 %v810, %v830
        %834 = vst.msk [vmem:[%s803] sm:$0xff] %vm596, %v833
        %835 = vst.msk [vmem:[%s778] sm:$0xff] %vm638, %v783
        %836 = vrot.lane.b32.xlu0 %v593, 104
        %v837 = vpop.permute.xlu0 %836
        %838 = vrot.lane.b32.xlu0 %v594, 104
        %v839 = vpop.permute.xlu0 %838
        %v841 = vsel %vm596, %v837, 0
        %v844 = vsel %vm596, %v839, 0
        %846 = vmatpush.bf16.xpose.msra.mxu0 0
        %847 = vmatpush.bf16.xpose.msra.mxu0 0
        %848 = vmatpush.bf16.xpose.msra.mxu0 0
        %849 = vmatpush.bf16.xpose.msra.mxu0 0
        %850 = vmatpush.bf16.xpose.msra.mxu0 0
        %851 = vmatpush.bf16.xpose.msra.mxu0 0
        %852 = vmatpush.bf16.xpose.msra.mxu0 0
        %853 = vmatpush.bf16.xpose.msra.mxu0 %v844
        %854 = vmatmul.bf16.gmra.mxu0 %v841
        %v855 = vpop.f32.mrf.mxu0
        %v856 = vadd.f32 0.0, %v855
        %v857 = vpop.f32.mrf.mxu0
        %858 = vdwg.mxu0
        %s859 = scalar_lea.vmem [#allocation3], 24
        %v860 = vld [vmem:[%s859] sm:$0xff]
        %v861 = vsel %vm596, %v856, -inf
        %862 = vmax.xlane.f32.xlu0 %v861
        %v863 = vpop.xlane.xlu0 %862
        %v864 = vmax.f32 %v860, %v863
        %v865 = vsub.f32 %v860, %v864
        %v866 = vmul.f32 %v865, 1.442695
        %v867 = vpow.pop %v866
        %869 = vset.pattern.permute.xlu0 0
        %870 = vperm.xlu0 %869, %v864
        %v871 = vpop.permute.xlu0 %870
        %v873 = vsub.f32 %v856, %v871
        %v874 = vmul.f32 %v873, 1.442695
        %v875 = vpow.pop %v874
        %s876 = scalar_lea.vmem [#allocation4], 24
        %v877 = vld [vmem:[%s876] sm:$0xff]
        %v878 = vmul.f32 %v867, %v877
        %v879 = vsel %vm596, %v875, 0.0
        %880 = vadd.xlane.f32.xlu0 %v879
        %v881 = vpop.xlane.xlu0 %880
        %v882 = vadd.f32 %v878, %v881
        %883 = vst.msk [vmem:[%s876] sm:$0xff] %vm638, %v882
        %s884 = scalar_lea.vmem [#allocation5], 24
        %v885 = vld [vmem:[%s884] sm:$0xff]
        %887 = vset.pattern.permute.xlu0 0
        %888 = vperm.xlu0 %887, %v867
        %v889 = vpop.permute.xlu0 %888
        %v891 = vmul.f32 %v889, %v885
        %v892 = vpack.c.bf16 %v875, %v875
        %893 = vrot.lane.b32.xlu0 %v595, 104
        %v894 = vpop.permute.xlu0 %893
        %v896 = vsel %vm596, %v892, 0
        %v899 = vsel %vm651, %v894, 0
        %901 = vmatpush.bf16.msra.mxu0 0
        %902 = vmatpush.bf16.msra.mxu0 0
        %903 = vmatpush.bf16.msra.mxu0 0
        %904 = vmatpush.bf16.msra.mxu0 0
        %905 = vmatpush.bf16.msra.mxu0 0
        %906 = vmatpush.bf16.msra.mxu0 0
        %907 = vmatpush.bf16.msra.mxu0 0
        %908 = vmatpush.bf16.msra.mxu0 %v899
        %909 = vmatmul.bf16.gmra.mxu0 %v896
        %v910 = vpop.f32.mrf.mxu0
        %v911 = vadd.f32 0.0, %v910
        %v912 = vpop.f32.mrf.mxu0
        %913 = vdwg.mxu0
        %v914 = vadd.f32 %v891, %v911
        %915 = vst.msk [vmem:[%s884] sm:$0xff] %vm596, %v914
        %916 = vst.msk [vmem:[%s859] sm:$0xff] %vm638, %v864
        // Predicated region
        $region81: #{tpu_custom_call.1} parent=47 // pred_check
          %p917 = pneg %p468
        $region82: #{tpu_custom_call.1} parent=47 // pred_check_branch
          %919 = sbr.rel (%p917) target = $region84
        $region83: #{tpu_custom_call.1} parent=47 // pred_region
          %v920 = vld [vmem:[#allocation17] sm:$0xf]
          %v921 = vld [vmem:[#allocation17 + $0x4] sm:$0xf]
          %v922 = vld [vmem:[#allocation17 + $0x8] sm:$0xf]
          %v923 = vld [vmem:[#allocation17 + $0xc] sm:$0xf]
          %v924 = vld [vmem:[#allocation5] sm:$0xff]
          %v925 = vld [vmem:[#allocation4] sm:$0xff]
          %v926 = vrcp.pop %v925
          %928 = vset.pattern.permute.xlu0 0
          %929 = vperm.xlu0 %928, %v926
          %v930 = vpop.permute.xlu0 %929
          %v932 = vmul.f32 %v924, %v930
          %v933 = vpack.c.bf16 %v932, %v932
          %v934 = vld [vmem:[%s721] sm:$0xff]
          %v935 = vld [vmem:[%s713] sm:$0xff]
          %v936 = vrcp.pop %v935
          %938 = vset.pattern.permute.xlu0 0
          %939 = vperm.xlu0 %938, %v936
          %v940 = vpop.permute.xlu0 %939
          %v942 = vmul.f32 %v934, %v940
          %v943 = vpack.c.bf16 %v942, %v942
          %v945 = vsel %vm596, %v943, 0
          %v948 = vsel %vm651, %v921, 0
          %950 = vmatpush.bf16.msra.mxu0 0
          %951 = vmatpush.bf16.msra.mxu0 0
          %952 = vmatpush.bf16.msra.mxu0 0
          %953 = vmatpush.bf16.msra.mxu0 0
          %954 = vmatpush.bf16.msra.mxu0 0
          %955 = vmatpush.bf16.msra.mxu0 0
          %956 = vmatpush.bf16.msra.mxu0 0
          %957 = vmatpush.bf16.msra.mxu0 %v948
          %958 = vmatmul.bf16.gmra.mxu0 %v945
          %v959 = vpop.f32.mrf.mxu0
          %v960 = vadd.f32 0.0, %v959
          %v961 = vpop.f32.mrf.mxu0
          %962 = vdwg.mxu0
          %v964 = vsel %vm596, %v933, 0
          %v967 = vsel %vm651, %v920, 0
          %969 = vmatpush.bf16.msra.mxu0 0
          %970 = vmatpush.bf16.msra.mxu0 0
          %971 = vmatpush.bf16.msra.mxu0 0
          %972 = vmatpush.bf16.msra.mxu0 0
          %973 = vmatpush.bf16.msra.mxu0 0
          %974 = vmatpush.bf16.msra.mxu0 0
          %975 = vmatpush.bf16.msra.mxu0 0
          %976 = vmatpush.bf16.msra.mxu0 %v967
          %977 = vmatmul.bf16.gmra.mxu0 %v964
          %v978 = vpop.f32.mrf.mxu0
          %v979 = vadd.f32 %v960, %v978
          %v980 = vpop.f32.mrf.mxu0
          %981 = vdwg.mxu0
          %v982 = vld [vmem:[%s803] sm:$0xff]
          %v983 = vld [vmem:[%s795] sm:$0xff]
          %v984 = vrcp.pop %v983
          %986 = vset.pattern.permute.xlu0 0
          %987 = vperm.xlu0 %986, %v984
          %v988 = vpop.permute.xlu0 %987
          %v990 = vmul.f32 %v982, %v988
          %v991 = vpack.c.bf16 %v990, %v990
          %v993 = vsel %vm596, %v991, 0
          %v996 = vsel %vm651, %v922, 0
          %998 = vmatpush.bf16.msra.mxu0 0
          %999 = vmatpush.bf16.msra.mxu0 0
          %1000 = vmatpush.bf16.msra.mxu0 0
          %1001 = vmatpush.bf16.msra.mxu0 0
          %1002 = vmatpush.bf16.msra.mxu0 0
          %1003 = vmatpush.bf16.msra.mxu0 0
          %1004 = vmatpush.bf16.msra.mxu0 0
          %1005 = vmatpush.bf16.msra.mxu0 %v996
          %1006 = vmatmul.bf16.gmra.mxu0 %v993
          %v1007 = vpop.f32.mrf.mxu0
          %v1008 = vadd.f32 0.0, %v1007
          %v1009 = vpop.f32.mrf.mxu0
          %1010 = vdwg.mxu0
          %v1011 = vadd.f32 %v979, %v1008
          %v1012 = vld [vmem:[%s884] sm:$0xff]
          %v1013 = vld [vmem:[%s876] sm:$0xff]
          %v1014 = vrcp.pop %v1013
          %1016 = vset.pattern.permute.xlu0 0
          %1017 = vperm.xlu0 %1016, %v1014
          %v1018 = vpop.permute.xlu0 %1017
          %v1020 = vmul.f32 %v1012, %v1018
          %v1021 = vpack.c.bf16 %v1020, %v1020
          %v1023 = vsel %vm596, %v1021, 0
          %v1026 = vsel %vm651, %v923, 0
          %1028 = vmatpush.bf16.msra.mxu0 0
          %1029 = vmatpush.bf16.msra.mxu0 0
          %1030 = vmatpush.bf16.msra.mxu0 0
          %1031 = vmatpush.bf16.msra.mxu0 0
          %1032 = vmatpush.bf16.msra.mxu0 0
          %1033 = vmatpush.bf16.msra.mxu0 0
          %1034 = vmatpush.bf16.msra.mxu0 0
          %1035 = vmatpush.bf16.msra.mxu0 %v1026
          %1036 = vmatmul.bf16.gmra.mxu0 %v1023
          %v1037 = vpop.f32.mrf.mxu0
          %v1038 = vadd.f32 0.0, %v1037
          %v1039 = vpop.f32.mrf.mxu0
          %1040 = vdwg.mxu0
          %v1041 = vadd.f32 %v1011, %v1038
          %1042 = vst.msk [vmem:[%s466] sm:$0xff] %vm541, %v1041
        $region84: #{tpu_custom_call.1} parent=47 // pred_fallthru
          _
        %s1043 = sand.u32 %s226, 1
        %s1044 = scalar_lea.sflag [#allocation8], %s1043
        %s1045 = sand.u32 %s226, 1
        %s1046 = smul.addr %s1045, 8
        %s1047 = scalar_lea.vmem [#allocation18], %s1046
        // Predicated region
        $region85: #{tpu_custom_call.1} parent=47 // pred_check
          %p1048 = pneg %p236
        $region86: #{tpu_custom_call.1} parent=47 // pred_check_branch
          %1050 = sbr.rel (%p1048) target = $region88
        $region87: #{tpu_custom_call.1} parent=47 // pred_region
          %1052 = vsyncadd %s1044, 0
          %s1053 = sadd.s32 %s35, %s34
          %s1054 = smul.addr %s1053, 8
          %s1055 = scalar_lea.hbm %s7, %s1054
          %s1057 = sshll.u32 %s1047, 4
          %s1058 = int_to_ptr.vmem [resolvable:$true] %s1057
          %s1059 = sshll.u32 %s1055, 4
          %s1060 = int_to_ptr.hbm [resolvable:$true] %s1059
          %1062 = dma.vmem_to_hbm [thread:$0]  %s1058, 128, %s1060, %s1044
        $region88: #{tpu_custom_call.1} parent=47 // pred_fallthru
          _
      $region48: #{tpu_custom_call.1} parent=5 // pred_fallthru
        _
      %p1063 = scmp.le.s32.totalorder 2, %s24
      // Predicated region
      $region89: #{tpu_custom_call.1} parent=5 // pred_check
        %p1064 = pneg %p1063
      $region90: #{tpu_custom_call.1} parent=5 // pred_check_branch
        %1066 = sbr.rel (%p1064) target = $region92
      $region91: #{tpu_custom_call.1} parent=5 // pred_region
        %s1067 = ssub.s32 %s24, 2
        // Predicated region
        $region93: #{tpu_custom_call.1} parent=91 // pred_check
          %p1068 = pneg %p242
        $region94: #{tpu_custom_call.1} parent=91 // pred_check_branch
          %1070 = sbr.rel (%p1068) target = $region96
        $region95: #{tpu_custom_call.1} parent=91 // pred_region
          %s1071 = sand.u32 %s227, 1
          %s1072 = scalar_lea.sflag [#allocation8], %s1071
          %s1073 = sand.u32 %s227, 1
          %s1074 = smul.addr %s1073, 8
          %s1075 = scalar_lea.vmem [#allocation18], %s1074
          %1077 = dma.done %s1072, 128
        $region96: #{tpu_custom_call.1} parent=91 // pred_fallthru
          _
      $region92: #{tpu_custom_call.1} parent=5 // pred_fallthru
        _
    $region6: #{tpu_custom_call.1} parent=1 // loop_footer
      %s28 = sadd.s32 1, %s24
    $region7: #{tpu_custom_call.1} parent=1 // loop_footer_branch
      %23 = sbr.rel target = $region3
    $region8: #{tpu_custom_call.1} parent=1 // loop_exit
      _
    %1078 = vsyncpa [#allocation7], 1
    %s1079 = scalar_lea.sflag [#allocation7], 1
    %1080 = vsyncpa %s1079, 1
    %1081 = vsyncpa [#allocation10], 1
    %s1082 = scalar_lea.sflag [#allocation10], 1
    %1083 = vsyncpa %s1082, 1
    %1084 = vsyncpa [#allocation13], 1
    %1085 = vsyncpa [#allocation16], 1
    %1086 = vsyncpa [#allocation8], 1
    %s1087 = scalar_lea.sflag [#allocation8], 1
    %1088 = vsyncpa %s1087, 1

</llo_original>
